<compile_context>
chip_gen: v7x
topology: tpu7x:2x2x1
jax: 0.10.0
libtpu: 0.0.40
codegen_flags: <defaults>
</compile_context>

<pallas_src>
import numpy as np
import jax
import jax.numpy as jnp
from jax.experimental import pallas as pl
from jax.experimental.pallas import tpu as pltpu

_LANE = 128


def _round_up(n, m):
    return ((n + m - 1) // m) * m


# --------------------------------------------------------------------------------------
# Kernel
# --------------------------------------------------------------------------------------
def action_type_head_kernel(
    lstm_ref, ctx_ref, gumbel_ref,                         # [TB,L], [TB,C], [TB,A_pad]
    w_embed_ref, b_embed_ref,                              # [L,H], [1,H]
    rb_w1_ref, rb_g1_ref, rb_b1_ref,                       # [R,H,H], [R,1,H], [R,1,H]
    rb_w2_ref, rb_g2_ref, rb_b2_ref,                       # [R,H,H], [R,1,H], [R,1,H]
    wg_all_ref, bg_all_ref,                                # fused gates: [C,3*128], [1,3*128]
    w1_ref, b1_ref,                                        # glu_1 out: [H,A_pad], [1,A_pad]
    wf_ref, bf_ref,                                        # fc_1:      [A_pad,H], [1,H]
    w2_ref, b2_ref,                                        # glu_2 out: [H,AE_pad], [1,AE_pad]
    w3_ref, b3_ref,                                        # glu_3 out: [L,AE_pad], [1,AE_pad]
    logits_out_ref, action_out_ref, ae_out_ref,
):
    f32 = jnp.float32
    lstm = lstm_ref[...]
    ctx = ctx_ref[...]
    H = w_embed_ref.shape[1]
    L = lstm_ref.shape[1]
    GP = bg_all_ref.shape[1] // 3                          # per-gate lane block (128)

    def dot(a, b):
        # Default precision: single MXU pass, f32 accumulation.
        return jnp.dot(a, b, preferred_element_type=jnp.float32)

    def layer_norm(v, gamma, beta):
        # Fused single-pass stats: sum and sum-of-squares.
        inv_n = 1.0 / v.shape[-1]
        mu = jnp.sum(v, axis=-1, keepdims=True) * inv_n
        ms = jnp.sum(v * v, axis=-1, keepdims=True) * inv_n
        var = ms - mu * mu
        return (v - mu) * jax.lax.rsqrt(var + 1e-5) * gamma + beta

    # ---- embed_fc ----
    x = dot(lstm, w_embed_ref[...]) + b_embed_ref[...]

    # ---- ResBlock1D stack (seq_len==1 -> conv == middle-tap matmul) ----
    n_res = rb_w1_ref.shape[0]
    for r in range(n_res):
        residual = x
        h = dot(x, rb_w1_ref[r])
        h = jnp.maximum(layer_norm(h, rb_g1_ref[r], rb_b1_ref[r]), 0.0)
        h = dot(h, rb_w2_ref[r])
        h = layer_norm(h, rb_g2_ref[r], rb_b2_ref[r])
        x = jnp.maximum(h + residual, 0.0)
    # (F.relu after the stack is a no-op: x is already >= 0 -> removed.)

    # ---- fused context gates for glu_1 / glu_2 / glu_3 (one MXU push) ----
    gates = jax.nn.sigmoid(dot(ctx, wg_all_ref[...]) + bg_all_ref[...])
    gate1 = gates[:, 0:H]                # tile-aligned slices (blocks start at lanes 0/128/256)
    gate2 = gates[:, GP:GP + H]
    gate3 = gates[:, 2 * GP:2 * GP + L]

    # ---- glu_1 -> action_type_logits (temperature == 1, no mask) ----
    logits = dot(gate1 * x, w1_ref[...]) + b1_ref[...]     # padded cols carry bias -1e9
    logits_out_ref[...] = logits

    # ---- categorical sampling (torch.multinomial over softmax) via Gumbel-max ----
    y = logits + gumbel_ref[...]
    m = jnp.max(y, axis=-1, keepdims=True)
    TB, A_pad = y.shape
    col = jax.lax.broadcasted_iota(jnp.int32, (TB, A_pad), 1)
    action = jnp.min(jnp.where(y >= m, col, A_pad), axis=-1, keepdims=True)   # [TB,1] int32
    action_out_ref[...] = jnp.broadcast_to(action, action_out_ref.shape)      # lane-dense store

    # ---- one-hot -> fc_1 -> relu -> glu_2 ; glu_3(lstm) ; sum ----
    # (one-hot matmul kept: at these sizes it is a single MXU push; a dynamic row
    #  gather from wf would only pay off at AlphaStar-scale action counts.)
    one_hot = (col == action).astype(f32)                                      # [TB,A_pad]
    z = jnp.maximum(dot(one_hot, wf_ref[...]) + bf_ref[...], 0.0)
    z = dot(gate2 * z, w2_ref[...]) + b2_ref[...]
    t = dot(gate3 * lstm, w3_ref[...]) + b3_ref[...]
    ae_out_ref[...] = z + t


# --------------------------------------------------------------------------------------
# Wrapper
# --------------------------------------------------------------------------------------
def prepare_params(p):
    """One-time packing: fuse gate weights, pad output dims to 128 lanes."""
    f32 = jnp.float32
    H = p["w_embed"].shape[1]
    C = p["wg1"].shape[0]
    L = p["wg3"].shape[1]
    A = p["w1"].shape[1]
    AE = p["w2"].shape[1]
    A_pad = _round_up(A, _LANE)
    AE_pad = _round_up(AE, _LANE)
    GP = _LANE

    wg_all = jnp.zeros((C, 3 * GP), f32)
    wg_all = (wg_all.at[:, 0:H].set(p["wg1"])
                     .at[:, GP:GP + H].set(p["wg2"])
                     .at[:, 2 * GP:2 * GP + L].set(p["wg3"]))
    bg_all = jnp.zeros((1, 3 * GP), f32)
    bg_all = (bg_all.at[:, 0:H].set(p["bg1"])
                     .at[:, GP:GP + H].set(p["bg2"])
                     .at[:, 2 * GP:2 * GP + L].set(p["bg3"]))

    w1 = jnp.zeros((H, A_pad), f32).at[:, :A].set(p["w1"])
    b1 = jnp.full((1, A_pad), -1e9, f32).at[:, :A].set(p["b1"])   # padded logits never sampled
    wf = jnp.zeros((A_pad, H), f32).at[:A, :].set(p["wf"])
    w2 = jnp.zeros((H, AE_pad), f32).at[:, :AE].set(p["w2"])
    b2 = jnp.zeros((1, AE_pad), f32).at[:, :AE].set(p["b2"])
    w3 = jnp.zeros((L, AE_pad), f32).at[:, :AE].set(p["w3"])
    b3 = jnp.zeros((1, AE_pad), f32).at[:, :AE].set(p["b3"])

    return dict(
        A=A, AE=AE,
        w_embed=p["w_embed"], b_embed=p["b_embed"],
        rb_w1=p["rb_w1"], rb_g1=p["rb_g1"], rb_b1=p["rb_b1"],
        rb_w2=p["rb_w2"], rb_g2=p["rb_g2"], rb_b2=p["rb_b2"],
        wg_all=wg_all, bg_all=bg_all,
        w1=w1, b1=b1, wf=wf, bf=p["bf"],
        w2=w2, b2=b2, w3=w3, b3=b3,
    )


def action_type_head(lstm_output, scalar_context, rng_key, prep):
    f32 = jnp.float32
    B, L = lstm_output.shape
    C = scalar_context.shape[1]
    A, AE = prep["A"], prep["AE"]
    A_pad = prep["w1"].shape[1]
    AE_pad = prep["w2"].shape[1]

    # Pad batch to a multiple of 8 sublanes; batch tile per grid step.
    B_pad = max(8, _round_up(B, 8))
    TB = min(B_pad, 128)

    lstm_p = jnp.zeros((B_pad, L), f32).at[:B].set(lstm_output.astype(f32))
    ctx_p = jnp.zeros((B_pad, C), f32).at[:B].set(scalar_context.astype(f32))

    # Gumbel-max noise, generated host-side (no TPU-only PRNG primitives in the kernel).
    u = jax.random.uniform(rng_key, (B_pad, A_pad), f32, minval=1e-7, maxval=1.0)
    u = jnp.clip(u, 1e-7, 1.0 - 1e-7)
    gumbel = -jnp.log(-jnp.log(u))

    weight_names = ["w_embed", "b_embed", "rb_w1", "rb_g1", "rb_b1",
                    "rb_w2", "rb_g2", "rb_b2", "wg_all", "bg_all",
                    "w1", "b1", "wf", "bf", "w2", "b2", "w3", "b3"]
    weights = [prep[n] for n in weight_names]

    def batch_spec(arr):
        nd = arr.ndim
        return pl.BlockSpec((TB,) + arr.shape[1:],
                            lambda i, nd=nd: (i,) + (0,) * (nd - 1))

    def weight_spec(arr):
        nd = arr.ndim
        return pl.BlockSpec(arr.shape, lambda i, nd=nd: (0,) * nd)

    in_specs = ([batch_spec(lstm_p), batch_spec(ctx_p), batch_spec(gumbel)]
                + [weight_spec(w) for w in weights])

    out_shape = (
        jax.ShapeDtypeStruct((B_pad, A_pad), f32),      # action_type_logits (lane-padded)
        jax.ShapeDtypeStruct((B_pad, _LANE), jnp.int32),  # action_type (broadcast over lanes)
        jax.ShapeDtypeStruct((B_pad, AE_pad), f32),     # autoregressive_embedding (lane-padded)
    )
    out_specs = (
        pl.BlockSpec((TB, A_pad), lambda i: (i, 0)),
        pl.BlockSpec((TB, _LANE), lambda i: (i, 0)),
        pl.BlockSpec((TB, AE_pad), lambda i: (i, 0)),
    )

    logits_p, action_p, ae_p = pl.pallas_call(
        action_type_head_kernel,
        grid=(B_pad // TB,),
        out_shape=out_shape,
        in_specs=in_specs,
        out_specs=out_specs,
        compiler_params=pltpu.CompilerParams(
            dimension_semantics=("parallel",)),   # batch axis shards across TCs on v7x
    )(lstm_p, ctx_p, gumbel, *weights)

    return logits_p[:B, :A], action_p[:B, :1], ae_p[:B, :AE]


# --------------------------------------------------------------------------------------
# Parameter init (torch-equivalent layouts) and pure-JAX reference
# --------------------------------------------------------------------------------------
def init_params(key, L, H, C, A, AE, R):
    ks = iter(jax.random.split(key, 40))
    nrm = lambda shape, s=0.1: (jax.random.normal(next(ks), shape, jnp.float32) * s)

    # Conv1d weights built in true torch layout [out, in, 3]; middle tap extracted (exact for L=1).
    conv1 = nrm((R, H, H, 3))
    conv2 = nrm((R, H, H, 3))
    return dict(
        w_embed=nrm((L, H)), b_embed=nrm((1, H), 0.01),
        rb_w1=jnp.transpose(conv1[:, :, :, 1], (0, 2, 1)),   # [R, in, out]
        rb_g1=1.0 + nrm((R, 1, H)), rb_b1=nrm((R, 1, H), 0.01),
        rb_w2=jnp.transpose(conv2[:, :, :, 1], (0, 2, 1)),
        rb_g2=1.0 + nrm((R, 1, H)), rb_b2=nrm((R, 1, H), 0.01),
        wg1=nrm((C, H)), bg1=nrm((1, H), 0.01), w1=nrm((H, A)), b1=nrm((1, A), 0.01),
        wf=nrm((A, H)), bf=nrm((1, H), 0.01),
        wg2=nrm((C, H)), bg2=nrm((1, H), 0.01), w2=nrm((H, AE)), b2=nrm((1, AE), 0.01),
        wg3=nrm((C, L)), bg3=nrm((1, L), 0.01), w3=nrm((L, AE)), b3=nrm((1, AE), 0.01),
    )


def reference(p, lstm, ctx, action):
    """Pure-JAX replica of the forward math (given the kernel-sampled action)."""
    def ln(v, g, b):
        mu = v.mean(-1, keepdims=True)
        var = ((v - mu) ** 2).mean(-1, keepdims=True)
        return (v - mu) / jnp.sqrt(var + 1e-5) * g + b

    x = jnp.dot(lstm, p["w_embed"]) + p["b_embed"]
    for r in range(p["rb_w1"].shape[0]):
        res = x
        h = jnp.maximum(ln(jnp.dot(x, p["rb_w1"][r]), p["rb_g1"][r], p["rb_b1"][r]), 0.0)
        h = ln(jnp.dot(h, p["rb_w2"][r]), p["rb_g2"][r], p["rb_b2"][r])
        x = jnp.maximum(h + res, 0.0)
    x = jnp.maximum(x, 0.0)
    gate1 = jax.nn.sigmoid(jnp.dot(ctx, p["wg1"]) + p["bg1"])
    logits = jnp.dot(gate1 * x, p["w1"]) + p["b1"]
    A = logits.shape[-1]
    one_hot = jax.nn.one_hot(action[:, 0], A, dtype=jnp.float32)
    z = jnp.maximum(jnp.dot(one_hot, p["wf"]) + p["bf"], 0.0)
    gate2 = jax.nn.sigmoid(jnp.dot(ctx, p["wg2"]) + p["bg2"])
    z = jnp.dot(gate2 * z, p["w2"]) + p["b2"]
    gate3 = jax.nn.sigmoid(jnp.dot(ctx, p["wg3"]) + p["bg3"])
    t = jnp.dot(gate3 * lstm, p["w3"]) + p["b3"]
    return logits, z + t


if __name__ == "__main__":
    # B=batch, L=lstm_dim, H=original_256, C=context_size, A=max_action_num,
    # AE=autoregressive_embedding_size, R=n_resblocks (small synthetic sizes).
    B, L, H, C, A, AE, R = 2, 32, 32, 16, 64, 48, 2

    key = jax.random.PRNGKey(0)
    k_lstm, k_ctx, k_par, k_samp = jax.random.split(key, 4)
    lstm_output = jax.random.normal(k_lstm, (B, L), jnp.float32)
    scalar_context = jax.random.normal(k_ctx, (B, C), jnp.float32)
    params = init_params(k_par, L, H, C, A, AE, R)
    prep = prepare_params(params)     # one-time padding/fusion (kept out of the per-step path)

    logits, action, ae = action_type_head(lstm_output, scalar_context, k_samp, prep)
    jax.block_until_ready((logits, action, ae))

    # Sanity / correctness checks against a pure-JAX reference.
    assert logits.shape == (B, A) and logits.dtype == jnp.float32
    assert action.shape == (B, 1) and action.dtype == jnp.int32
    assert ae.shape == (B, AE) and ae.dtype == jnp.float32
    a_np = np.asarray(action)
    assert np.all((a_np >= 0) & (a_np < A))
    ref_logits, ref_ae = reference(params, lstm_output, scalar_context, a_np)
    assert np.all(np.isfinite(np.asarray(logits))) and np.all(np.isfinite(np.asarray(ae)))
    assert np.allclose(np.asarray(logits), np.asarray(ref_logits), rtol=2e-2, atol=2e-2)
    assert np.allclose(np.asarray(ae), np.asarray(ref_ae), rtol=2e-2, atol=2e-2)

    print("KERNEL_OK")
</pallas_src>

<mosaic_0001>
module attributes {stable_mosaic.version = 11 : i64} {
  func.func @action_type_head_kernel(%arg0: i32, %arg1: memref<8x32xf32, #tpu.memory_space<vmem>>, %arg2: memref<8x16xf32, #tpu.memory_space<vmem>>, %arg3: memref<8x128xf32, #tpu.memory_space<vmem>>, %arg4: memref<32x32xf32, #tpu.memory_space<vmem>>, %arg5: memref<1x32xf32, #tpu.memory_space<vmem>>, %arg6: memref<2x32x32xf32, #tpu.memory_space<vmem>>, %arg7: memref<2x1x32xf32, #tpu.memory_space<vmem>>, %arg8: memref<2x1x32xf32, #tpu.memory_space<vmem>>, %arg9: memref<2x32x32xf32, #tpu.memory_space<vmem>>, %arg10: memref<2x1x32xf32, #tpu.memory_space<vmem>>, %arg11: memref<2x1x32xf32, #tpu.memory_space<vmem>>, %arg12: memref<16x384xf32, #tpu.memory_space<vmem>>, %arg13: memref<1x384xf32, #tpu.memory_space<vmem>>, %arg14: memref<32x128xf32, #tpu.memory_space<vmem>>, %arg15: memref<1x128xf32, #tpu.memory_space<vmem>>, %arg16: memref<128x32xf32, #tpu.memory_space<vmem>>, %arg17: memref<1x32xf32, #tpu.memory_space<vmem>>, %arg18: memref<32x128xf32, #tpu.memory_space<vmem>>, %arg19: memref<1x128xf32, #tpu.memory_space<vmem>>, %arg20: memref<32x128xf32, #tpu.memory_space<vmem>>, %arg21: memref<1x128xf32, #tpu.memory_space<vmem>>, %arg22: memref<8x128xf32, #tpu.memory_space<vmem>>, %arg23: memref<8x128xi32, #tpu.memory_space<vmem>>, %arg24: memref<8x128xf32, #tpu.memory_space<vmem>>) attributes {dimension_semantics = [#tpu.dimension_semantics<parallel>], iteration_bounds = array<i64: 1>, scalar_prefetch = 0 : i64, scratch_operands = 0 : i64, tpu.core_type = #tpu.core_type<tc>, window_params = [{transform_indices = @transform_0, window_bounds = array<i64: 8, 32>}, {transform_indices = @transform_1, window_bounds = array<i64: 8, 16>}, {transform_indices = @transform_2, window_bounds = array<i64: 8, 128>}, {pipeline_mode = #tpu.pipeline_mode<synchronous>, transform_indices = @transform_3, window_bounds = array<i64: 32, 32>}, {pipeline_mode = #tpu.pipeline_mode<synchronous>, transform_indices = @transform_4, window_bounds = array<i64: 1, 32>}, {pipeline_mode = #tpu.pipeline_mode<synchronous>, transform_indices = @transform_5, window_bounds = array<i64: 2, 32, 32>}, {pipeline_mode = #tpu.pipeline_mode<synchronous>, transform_indices = @transform_6, window_bounds = array<i64: 2, 1, 32>}, {pipeline_mode = #tpu.pipeline_mode<synchronous>, transform_indices = @transform_7, window_bounds = array<i64: 2, 1, 32>}, {pipeline_mode = #tpu.pipeline_mode<synchronous>, transform_indices = @transform_8, window_bounds = array<i64: 2, 32, 32>}, {pipeline_mode = #tpu.pipeline_mode<synchronous>, transform_indices = @transform_9, window_bounds = array<i64: 2, 1, 32>}, {pipeline_mode = #tpu.pipeline_mode<synchronous>, transform_indices = @transform_10, window_bounds = array<i64: 2, 1, 32>}, {pipeline_mode = #tpu.pipeline_mode<synchronous>, transform_indices = @transform_11, window_bounds = array<i64: 16, 384>}, {pipeline_mode = #tpu.pipeline_mode<synchronous>, transform_indices = @transform_12, window_bounds = array<i64: 1, 384>}, {pipeline_mode = #tpu.pipeline_mode<synchronous>, transform_indices = @transform_13, window_bounds = array<i64: 32, 128>}, {pipeline_mode = #tpu.pipeline_mode<synchronous>, transform_indices = @transform_14, window_bounds = array<i64: 1, 128>}, {pipeline_mode = #tpu.pipeline_mode<synchronous>, transform_indices = @transform_15, window_bounds = array<i64: 128, 32>}, {pipeline_mode = #tpu.pipeline_mode<synchronous>, transform_indices = @transform_16, window_bounds = array<i64: 1, 32>}, {pipeline_mode = #tpu.pipeline_mode<synchronous>, transform_indices = @transform_17, window_bounds = array<i64: 32, 128>}, {pipeline_mode = #tpu.pipeline_mode<synchronous>, transform_indices = @transform_18, window_bounds = array<i64: 1, 128>}, {pipeline_mode = #tpu.pipeline_mode<synchronous>, transform_indices = @transform_19, window_bounds = array<i64: 32, 128>}, {pipeline_mode = #tpu.pipeline_mode<synchronous>, transform_indices = @transform_20, window_bounds = array<i64: 1, 128>}, {transform_indices = @transform_21, window_bounds = array<i64: 8, 128>}, {transform_indices = @transform_22, window_bounds = array<i64: 8, 128>}, {transform_indices = @transform_23, window_bounds = array<i64: 8, 128>}]} {
    %c0 = arith.constant 0 : index
    %c0_0 = arith.constant 0 : index
    %0 = vector.load %arg1[%c0, %c0_0] : memref<8x32xf32, #tpu.memory_space<vmem>>, vector<8x32xf32>
    %c0_1 = arith.constant 0 : index
    %c0_2 = arith.constant 0 : index
    %1 = vector.load %arg2[%c0_1, %c0_2] : memref<8x16xf32, #tpu.memory_space<vmem>>, vector<8x16xf32>
    %c0_3 = arith.constant 0 : index
    %c0_4 = arith.constant 0 : index
    %2 = vector.load %arg4[%c0_3, %c0_4] : memref<32x32xf32, #tpu.memory_space<vmem>>, vector<32x32xf32>
    %cst = arith.constant dense<0.000000e+00> : vector<8x32xf32>
    %3 = tpu.matmul %0, %2, %cst {dimension_numbers = #tpu.dot_dimension_numbers<[1], [0], [0], [1], [0, 0, 1, 1], [], []>} : vector<8x32xf32>, vector<32x32xf32>, vector<8x32xf32> -> vector<8x32xf32>
    %c0_5 = arith.constant 0 : index
    %c0_6 = arith.constant 0 : index
    %4 = vector.load %arg5[%c0_5, %c0_6] : memref<1x32xf32, #tpu.memory_space<vmem>>, vector<1x32xf32>
    %5 = vector.broadcast %4 : vector<1x32xf32> to vector<8x32xf32>
    %6 = arith.addf %3, %5 : vector<8x32xf32>
    %c0_7 = arith.constant 0 : index
    %c0_8 = arith.constant 0 : index
    %c0_9 = arith.constant 0 : index
    %7 = vector.load %arg6[%c0_7, %c0_8, %c0_9] : memref<2x32x32xf32, #tpu.memory_space<vmem>>, vector<1x32x32xf32>
    %8 = vector.shape_cast %7 : vector<1x32x32xf32> to vector<32x32xf32>
    %cst_10 = arith.constant dense<0.000000e+00> : vector<8x32xf32>
    %9 = tpu.matmul %6, %8, %cst_10 {dimension_numbers = #tpu.dot_dimension_numbers<[1], [0], [0], [1], [0, 0, 1, 1], [], []>} : vector<8x32xf32>, vector<32x32xf32>, vector<8x32xf32> -> vector<8x32xf32>
    %c0_11 = arith.constant 0 : index
    %c0_12 = arith.constant 0 : index
    %c0_13 = arith.constant 0 : index
    %10 = vector.load %arg7[%c0_11, %c0_12, %c0_13] : memref<2x1x32xf32, #tpu.memory_space<vmem>>, vector<1x1x32xf32>
    %11 = vector.shape_cast %10 : vector<1x1x32xf32> to vector<1x32xf32>
    %c0_14 = arith.constant 0 : index
    %c0_15 = arith.constant 0 : index
    %c0_16 = arith.constant 0 : index
    %12 = vector.load %arg8[%c0_14, %c0_15, %c0_16] : memref<2x1x32xf32, #tpu.memory_space<vmem>>, vector<1x1x32xf32>
    %13 = vector.shape_cast %12 : vector<1x1x32xf32> to vector<1x32xf32>
    %cst_17 = arith.constant dense<0.000000e+00> : vector<8xf32>
    %14 = vector.multi_reduction <add>, %9, %cst_17 [1] : vector<8x32xf32> to vector<8xf32>
    %15 = vector.shape_cast %14 : vector<8xf32> to vector<8x1xf32>
    %cst_18 = arith.constant 3.125000e-02 : f32
    %16 = vector.broadcast %cst_18 : f32 to vector<8x1xf32>
    %17 = arith.mulf %15, %16 : vector<8x1xf32>
    %18 = arith.mulf %9, %9 : vector<8x32xf32>
    %cst_19 = arith.constant dense<0.000000e+00> : vector<8xf32>
    %19 = vector.multi_reduction <add>, %18, %cst_19 [1] : vector<8x32xf32> to vector<8xf32>
    %20 = vector.shape_cast %19 : vector<8xf32> to vector<8x1xf32>
    %cst_20 = arith.constant 3.125000e-02 : f32
    %21 = vector.broadcast %cst_20 : f32 to vector<8x1xf32>
    %22 = arith.mulf %20, %21 : vector<8x1xf32>
    %23 = arith.mulf %17, %17 : vector<8x1xf32>
    %24 = arith.subf %22, %23 : vector<8x1xf32>
    %25 = vector.broadcast %17 : vector<8x1xf32> to vector<8x32xf32>
    %26 = arith.subf %9, %25 : vector<8x32xf32>
    %cst_21 = arith.constant 9.99999974E-6 : f32
    %27 = vector.broadcast %cst_21 : f32 to vector<8x1xf32>
    %28 = arith.addf %24, %27 : vector<8x1xf32>
    %29 = math.rsqrt %28 : vector<8x1xf32>
    %30 = vector.broadcast %29 : vector<8x1xf32> to vector<8x32xf32>
    %31 = arith.mulf %26, %30 : vector<8x32xf32>
    %32 = vector.broadcast %11 : vector<1x32xf32> to vector<8x32xf32>
    %33 = arith.mulf %31, %32 : vector<8x32xf32>
    %34 = vector.broadcast %13 : vector<1x32xf32> to vector<8x32xf32>
    %35 = arith.addf %33, %34 : vector<8x32xf32>
    %cst_22 = arith.constant 0.000000e+00 : f32
    %36 = vector.broadcast %cst_22 : f32 to vector<8x32xf32>
    %37 = arith.maximumf %35, %36 : vector<8x32xf32>
    %c0_23 = arith.constant 0 : index
    %c0_24 = arith.constant 0 : index
    %c0_25 = arith.constant 0 : index
    %38 = vector.load %arg9[%c0_23, %c0_24, %c0_25] : memref<2x32x32xf32, #tpu.memory_space<vmem>>, vector<1x32x32xf32>
    %39 = vector.shape_cast %38 : vector<1x32x32xf32> to vector<32x32xf32>
    %cst_26 = arith.constant dense<0.000000e+00> : vector<8x32xf32>
    %40 = tpu.matmul %37, %39, %cst_26 {dimension_numbers = #tpu.dot_dimension_numbers<[1], [0], [0], [1], [0, 0, 1, 1], [], []>} : vector<8x32xf32>, vector<32x32xf32>, vector<8x32xf32> -> vector<8x32xf32>
    %c0_27 = arith.constant 0 : index
    %c0_28 = arith.constant 0 : index
    %c0_29 = arith.constant 0 : index
    %41 = vector.load %arg10[%c0_27, %c0_28, %c0_29] : memref<2x1x32xf32, #tpu.memory_space<vmem>>, vector<1x1x32xf32>
    %42 = vector.shape_cast %41 : vector<1x1x32xf32> to vector<1x32xf32>
    %c0_30 = arith.constant 0 : index
    %c0_31 = arith.constant 0 : index
    %c0_32 = arith.constant 0 : index
    %43 = vector.load %arg11[%c0_30, %c0_31, %c0_32] : memref<2x1x32xf32, #tpu.memory_space<vmem>>, vector<1x1x32xf32>
    %44 = vector.shape_cast %43 : vector<1x1x32xf32> to vector<1x32xf32>
    %cst_33 = arith.constant dense<0.000000e+00> : vector<8xf32>
    %45 = vector.multi_reduction <add>, %40, %cst_33 [1] : vector<8x32xf32> to vector<8xf32>
    %46 = vector.shape_cast %45 : vector<8xf32> to vector<8x1xf32>
    %cst_34 = arith.constant 3.125000e-02 : f32
    %47 = vector.broadcast %cst_34 : f32 to vector<8x1xf32>
    %48 = arith.mulf %46, %47 : vector<8x1xf32>
    %49 = arith.mulf %40, %40 : vector<8x32xf32>
    %cst_35 = arith.constant dense<0.000000e+00> : vector<8xf32>
    %50 = vector.multi_reduction <add>, %49, %cst_35 [1] : vector<8x32xf32> to vector<8xf32>
    %51 = vector.shape_cast %50 : vector<8xf32> to vector<8x1xf32>
    %cst_36 = arith.constant 3.125000e-02 : f32
    %52 = vector.broadcast %cst_36 : f32 to vector<8x1xf32>
    %53 = arith.mulf %51, %52 : vector<8x1xf32>
    %54 = arith.mulf %48, %48 : vector<8x1xf32>
    %55 = arith.subf %53, %54 : vector<8x1xf32>
    %56 = vector.broadcast %48 : vector<8x1xf32> to vector<8x32xf32>
    %57 = arith.subf %40, %56 : vector<8x32xf32>
    %cst_37 = arith.constant 9.99999974E-6 : f32
    %58 = vector.broadcast %cst_37 : f32 to vector<8x1xf32>
    %59 = arith.addf %55, %58 : vector<8x1xf32>
    %60 = math.rsqrt %59 : vector<8x1xf32>
    %61 = vector.broadcast %60 : vector<8x1xf32> to vector<8x32xf32>
    %62 = arith.mulf %57, %61 : vector<8x32xf32>
    %63 = vector.broadcast %42 : vector<1x32xf32> to vector<8x32xf32>
    %64 = arith.mulf %62, %63 : vector<8x32xf32>
    %65 = vector.broadcast %44 : vector<1x32xf32> to vector<8x32xf32>
    %66 = arith.addf %64, %65 : vector<8x32xf32>
    %67 = arith.addf %66, %6 : vector<8x32xf32>
    %cst_38 = arith.constant 0.000000e+00 : f32
    %68 = vector.broadcast %cst_38 : f32 to vector<8x32xf32>
    %69 = arith.maximumf %67, %68 : vector<8x32xf32>
    %c1 = arith.constant 1 : index
    %c0_39 = arith.constant 0 : index
    %c0_40 = arith.constant 0 : index
    %70 = vector.load %arg6[%c1, %c0_39, %c0_40] : memref<2x32x32xf32, #tpu.memory_space<vmem>>, vector<1x32x32xf32>
    %71 = vector.shape_cast %70 : vector<1x32x32xf32> to vector<32x32xf32>
    %cst_41 = arith.constant dense<0.000000e+00> : vector<8x32xf32>
    %72 = tpu.matmul %69, %71, %cst_41 {dimension_numbers = #tpu.dot_dimension_numbers<[1], [0], [0], [1], [0, 0, 1, 1], [], []>} : vector<8x32xf32>, vector<32x32xf32>, vector<8x32xf32> -> vector<8x32xf32>
    %c1_42 = arith.constant 1 : index
    %c0_43 = arith.constant 0 : index
    %c0_44 = arith.constant 0 : index
    %73 = vector.load %arg7[%c1_42, %c0_43, %c0_44] : memref<2x1x32xf32, #tpu.memory_space<vmem>>, vector<1x1x32xf32>
    %74 = vector.shape_cast %73 : vector<1x1x32xf32> to vector<1x32xf32>
    %c1_45 = arith.constant 1 : index
    %c0_46 = arith.constant 0 : index
    %c0_47 = arith.constant 0 : index
    %75 = vector.load %arg8[%c1_45, %c0_46, %c0_47] : memref<2x1x32xf32, #tpu.memory_space<vmem>>, vector<1x1x32xf32>
    %76 = vector.shape_cast %75 : vector<1x1x32xf32> to vector<1x32xf32>
    %cst_48 = arith.constant dense<0.000000e+00> : vector<8xf32>
    %77 = vector.multi_reduction <add>, %72, %cst_48 [1] : vector<8x32xf32> to vector<8xf32>
    %78 = vector.shape_cast %77 : vector<8xf32> to vector<8x1xf32>
    %cst_49 = arith.constant 3.125000e-02 : f32
    %79 = vector.broadcast %cst_49 : f32 to vector<8x1xf32>
    %80 = arith.mulf %78, %79 : vector<8x1xf32>
    %81 = arith.mulf %72, %72 : vector<8x32xf32>
    %cst_50 = arith.constant dense<0.000000e+00> : vector<8xf32>
    %82 = vector.multi_reduction <add>, %81, %cst_50 [1] : vector<8x32xf32> to vector<8xf32>
    %83 = vector.shape_cast %82 : vector<8xf32> to vector<8x1xf32>
    %cst_51 = arith.constant 3.125000e-02 : f32
    %84 = vector.broadcast %cst_51 : f32 to vector<8x1xf32>
    %85 = arith.mulf %83, %84 : vector<8x1xf32>
    %86 = arith.mulf %80, %80 : vector<8x1xf32>
    %87 = arith.subf %85, %86 : vector<8x1xf32>
    %88 = vector.broadcast %80 : vector<8x1xf32> to vector<8x32xf32>
    %89 = arith.subf %72, %88 : vector<8x32xf32>
    %cst_52 = arith.constant 9.99999974E-6 : f32
    %90 = vector.broadcast %cst_52 : f32 to vector<8x1xf32>
    %91 = arith.addf %87, %90 : vector<8x1xf32>
    %92 = math.rsqrt %91 : vector<8x1xf32>
    %93 = vector.broadcast %92 : vector<8x1xf32> to vector<8x32xf32>
    %94 = arith.mulf %89, %93 : vector<8x32xf32>
    %95 = vector.broadcast %74 : vector<1x32xf32> to vector<8x32xf32>
    %96 = arith.mulf %94, %95 : vector<8x32xf32>
    %97 = vector.broadcast %76 : vector<1x32xf32> to vector<8x32xf32>
    %98 = arith.addf %96, %97 : vector<8x32xf32>
    %cst_53 = arith.constant 0.000000e+00 : f32
    %99 = vector.broadcast %cst_53 : f32 to vector<8x32xf32>
    %100 = arith.maximumf %98, %99 : vector<8x32xf32>
    %c1_54 = arith.constant 1 : index
    %c0_55 = arith.constant 0 : index
    %c0_56 = arith.constant 0 : index
    %101 = vector.load %arg9[%c1_54, %c0_55, %c0_56] : memref<2x32x32xf32, #tpu.memory_space<vmem>>, vector<1x32x32xf32>
    %102 = vector.shape_cast %101 : vector<1x32x32xf32> to vector<32x32xf32>
    %cst_57 = arith.constant dense<0.000000e+00> : vector<8x32xf32>
    %103 = tpu.matmul %100, %102, %cst_57 {dimension_numbers = #tpu.dot_dimension_numbers<[1], [0], [0], [1], [0, 0, 1, 1], [], []>} : vector<8x32xf32>, vector<32x32xf32>, vector<8x32xf32> -> vector<8x32xf32>
    %c1_58 = arith.constant 1 : index
    %c0_59 = arith.constant 0 : index
    %c0_60 = arith.constant 0 : index
    %104 = vector.load %arg10[%c1_58, %c0_59, %c0_60] : memref<2x1x32xf32, #tpu.memory_space<vmem>>, vector<1x1x32xf32>
    %105 = vector.shape_cast %104 : vector<1x1x32xf32> to vector<1x32xf32>
    %c1_61 = arith.constant 1 : index
    %c0_62 = arith.constant 0 : index
    %c0_63 = arith.constant 0 : index
    %106 = vector.load %arg11[%c1_61, %c0_62, %c0_63] : memref<2x1x32xf32, #tpu.memory_space<vmem>>, vector<1x1x32xf32>
    %107 = vector.shape_cast %106 : vector<1x1x32xf32> to vector<1x32xf32>
    %cst_64 = arith.constant dense<0.000000e+00> : vector<8xf32>
    %108 = vector.multi_reduction <add>, %103, %cst_64 [1] : vector<8x32xf32> to vector<8xf32>
    %109 = vector.shape_cast %108 : vector<8xf32> to vector<8x1xf32>
    %cst_65 = arith.constant 3.125000e-02 : f32
    %110 = vector.broadcast %cst_65 : f32 to vector<8x1xf32>
    %111 = arith.mulf %109, %110 : vector<8x1xf32>
    %112 = arith.mulf %103, %103 : vector<8x32xf32>
    %cst_66 = arith.constant dense<0.000000e+00> : vector<8xf32>
    %113 = vector.multi_reduction <add>, %112, %cst_66 [1] : vector<8x32xf32> to vector<8xf32>
    %114 = vector.shape_cast %113 : vector<8xf32> to vector<8x1xf32>
    %cst_67 = arith.constant 3.125000e-02 : f32
    %115 = vector.broadcast %cst_67 : f32 to vector<8x1xf32>
    %116 = arith.mulf %114, %115 : vector<8x1xf32>
    %117 = arith.mulf %111, %111 : vector<8x1xf32>
    %118 = arith.subf %116, %117 : vector<8x1xf32>
    %119 = vector.broadcast %111 : vector<8x1xf32> to vector<8x32xf32>
    %120 = arith.subf %103, %119 : vector<8x32xf32>
    %cst_68 = arith.constant 9.99999974E-6 : f32
    %121 = vector.broadcast %cst_68 : f32 to vector<8x1xf32>
    %122 = arith.addf %118, %121 : vector<8x1xf32>
    %123 = math.rsqrt %122 : vector<8x1xf32>
    %124 = vector.broadcast %123 : vector<8x1xf32> to vector<8x32xf32>
    %125 = arith.mulf %120, %124 : vector<8x32xf32>
    %126 = vector.broadcast %105 : vector<1x32xf32> to vector<8x32xf32>
    %127 = arith.mulf %125, %126 : vector<8x32xf32>
    %128 = vector.broadcast %107 : vector<1x32xf32> to vector<8x32xf32>
    %129 = arith.addf %127, %128 : vector<8x32xf32>
    %130 = arith.addf %129, %69 : vector<8x32xf32>
    %cst_69 = arith.constant 0.000000e+00 : f32
    %131 = vector.broadcast %cst_69 : f32 to vector<8x32xf32>
    %132 = arith.maximumf %130, %131 : vector<8x32xf32>
    %c0_70 = arith.constant 0 : index
    %c0_71 = arith.constant 0 : index
    %133 = vector.load %arg12[%c0_70, %c0_71] : memref<16x384xf32, #tpu.memory_space<vmem>>, vector<16x384xf32>
    %cst_72 = arith.constant dense<0.000000e+00> : vector<8x384xf32>
    %134 = tpu.matmul %1, %133, %cst_72 {dimension_numbers = #tpu.dot_dimension_numbers<[1], [0], [0], [1], [0, 0, 1, 1], [], []>} : vector<8x16xf32>, vector<16x384xf32>, vector<8x384xf32> -> vector<8x384xf32>
    %c0_73 = arith.constant 0 : index
    %c0_74 = arith.constant 0 : index
    %135 = vector.load %arg13[%c0_73, %c0_74] : memref<1x384xf32, #tpu.memory_space<vmem>>, vector<1x384xf32>
    %136 = vector.broadcast %135 : vector<1x384xf32> to vector<8x384xf32>
    %137 = arith.addf %134, %136 : vector<8x384xf32>
    %138 = arith.negf %137 : vector<8x384xf32>
    %139 = math.exp %138 : vector<8x384xf32>
    %cst_75 = arith.constant 1.000000e+00 : f32
    %140 = vector.broadcast %cst_75 : f32 to vector<8x384xf32>
    %141 = arith.addf %140, %139 : vector<8x384xf32>
    %142 = arith.divf %140, %141 : vector<8x384xf32>
    %143 = vector.extract_strided_slice %142 {offsets = [0, 0], sizes = [8, 32], strides = [1, 1]} : vector<8x384xf32> to vector<8x32xf32>
    %144 = vector.extract_strided_slice %142 {offsets = [0, 128], sizes = [8, 32], strides = [1, 1]} : vector<8x384xf32> to vector<8x32xf32>
    %145 = vector.extract_strided_slice %142 {offsets = [0, 256], sizes = [8, 32], strides = [1, 1]} : vector<8x384xf32> to vector<8x32xf32>
    %146 = arith.mulf %143, %132 : vector<8x32xf32>
    %c0_76 = arith.constant 0 : index
    %c0_77 = arith.constant 0 : index
    %147 = vector.load %arg14[%c0_76, %c0_77] : memref<32x128xf32, #tpu.memory_space<vmem>>, vector<32x128xf32>
    %cst_78 = arith.constant dense<0.000000e+00> : vector<8x128xf32>
    %148 = tpu.matmul %146, %147, %cst_78 {dimension_numbers = #tpu.dot_dimension_numbers<[1], [0], [0], [1], [0, 0, 1, 1], [], []>} : vector<8x32xf32>, vector<32x128xf32>, vector<8x128xf32> -> vector<8x128xf32>
    %c0_79 = arith.constant 0 : index
    %c0_80 = arith.constant 0 : index
    %149 = vector.load %arg15[%c0_79, %c0_80] : memref<1x128xf32, #tpu.memory_space<vmem>>, vector<1x128xf32>
    %150 = vector.broadcast %149 : vector<1x128xf32> to vector<8x128xf32>
    %151 = arith.addf %148, %150 : vector<8x128xf32>
    %c0_81 = arith.constant 0 : index
    %c0_82 = arith.constant 0 : index
    %152 = vector.load %arg22[%c0_81, %c0_82] : memref<8x128xf32, #tpu.memory_space<vmem>>, vector<8x128xf32>
    tpu.vector_store %arg22[%c0_81, %c0_82], %151 {strides = array<i32>} : memref<8x128xf32, #tpu.memory_space<vmem>>, vector<8x128xf32>,
    %c0_83 = arith.constant 0 : index
    %c0_84 = arith.constant 0 : index
    %153 = vector.load %arg3[%c0_83, %c0_84] : memref<8x128xf32, #tpu.memory_space<vmem>>, vector<8x128xf32>
    %154 = arith.addf %151, %153 : vector<8x128xf32>
    %cst_85 = arith.constant dense<0xFF800000> : vector<8xf32>
    %155 = vector.multi_reduction <maximumf>, %154, %cst_85 [1] : vector<8x128xf32> to vector<8xf32>
    %156 = vector.shape_cast %155 : vector<8xf32> to vector<8x1xf32>
    %157 = tpu.iota {dimensions = array<i32: 1>} : vector<8x128xi32>
    %158 = vector.broadcast %156 : vector<8x1xf32> to vector<8x128xf32>
    %159 = arith.cmpf oge, %154, %158 : vector<8x128xf32>
    %c128_i32 = arith.constant 128 : i32
    %160 = vector.broadcast %c128_i32 : i32 to vector<8x128xi32>
    %161 = arith.select %159, %157, %160 : vector<8x128xi1>, vector<8x128xi32>
    %cst_86 = arith.constant dense<2147483647> : vector<8xi32>
    %162 = vector.multi_reduction <minsi>, %161, %cst_86 [1] : vector<8x128xi32> to vector<8xi32>
    %163 = vector.shape_cast %162 : vector<8xi32> to vector<8x1xi32>
    %164 = vector.shape_cast %163 : vector<8x1xi32> to vector<8x1xi32>
    %165 = vector.broadcast %164 : vector<8x1xi32> to vector<8x128xi32>
    %c0_87 = arith.constant 0 : index
    %c0_88 = arith.constant 0 : index
    %166 = vector.load %arg23[%c0_87, %c0_88] : memref<8x128xi32, #tpu.memory_space<vmem>>, vector<8x128xi32>
    tpu.vector_store %arg23[%c0_87, %c0_88], %165 {strides = array<i32>} : memref<8x128xi32, #tpu.memory_space<vmem>>, vector<8x128xi32>,
    %167 = vector.broadcast %163 : vector<8x1xi32> to vector<8x128xi32>
    %168 = arith.cmpi eq, %157, %167 : vector<8x128xi32>
    %169 = arith.extui %168 : vector<8x128xi1> to vector<8x128xi32>
    %170 = arith.sitofp %169 : vector<8x128xi32> to vector<8x128xf32>
    %c0_89 = arith.constant 0 : index
    %c0_90 = arith.constant 0 : index
    %171 = vector.load %arg16[%c0_89, %c0_90] : memref<128x32xf32, #tpu.memory_space<vmem>>, vector<128x32xf32>
    %cst_91 = arith.constant dense<0.000000e+00> : vector<8x32xf32>
    %172 = tpu.matmul %170, %171, %cst_91 {dimension_numbers = #tpu.dot_dimension_numbers<[1], [0], [0], [1], [0, 0, 1, 1], [], []>} : vector<8x128xf32>, vector<128x32xf32>, vector<8x32xf32> -> vector<8x32xf32>
    %c0_92 = arith.constant 0 : index
    %c0_93 = arith.constant 0 : index
    %173 = vector.load %arg17[%c0_92, %c0_93] : memref<1x32xf32, #tpu.memory_space<vmem>>, vector<1x32xf32>
    %174 = vector.broadcast %173 : vector<1x32xf32> to vector<8x32xf32>
    %175 = arith.addf %172, %174 : vector<8x32xf32>
    %cst_94 = arith.constant 0.000000e+00 : f32
    %176 = vector.broadcast %cst_94 : f32 to vector<8x32xf32>
    %177 = arith.maximumf %175, %176 : vector<8x32xf32>
    %178 = arith.mulf %144, %177 : vector<8x32xf32>
    %c0_95 = arith.constant 0 : index
    %c0_96 = arith.constant 0 : index
    %179 = vector.load %arg18[%c0_95, %c0_96] : memref<32x128xf32, #tpu.memory_space<vmem>>, vector<32x128xf32>
    %cst_97 = arith.constant dense<0.000000e+00> : vector<8x128xf32>
    %180 = tpu.matmul %178, %179, %cst_97 {dimension_numbers = #tpu.dot_dimension_numbers<[1], [0], [0], [1], [0, 0, 1, 1], [], []>} : vector<8x32xf32>, vector<32x128xf32>, vector<8x128xf32> -> vector<8x128xf32>
    %c0_98 = arith.constant 0 : index
    %c0_99 = arith.constant 0 : index
    %181 = vector.load %arg19[%c0_98, %c0_99] : memref<1x128xf32, #tpu.memory_space<vmem>>, vector<1x128xf32>
    %182 = vector.broadcast %181 : vector<1x128xf32> to vector<8x128xf32>
    %183 = arith.addf %180, %182 : vector<8x128xf32>
    %184 = arith.mulf %145, %0 : vector<8x32xf32>
    %c0_100 = arith.constant 0 : index
    %c0_101 = arith.constant 0 : index
    %185 = vector.load %arg20[%c0_100, %c0_101] : memref<32x128xf32, #tpu.memory_space<vmem>>, vector<32x128xf32>
    %cst_102 = arith.constant dense<0.000000e+00> : vector<8x128xf32>
    %186 = tpu.matmul %184, %185, %cst_102 {dimension_numbers = #tpu.dot_dimension_numbers<[1], [0], [0], [1], [0, 0, 1, 1], [], []>} : vector<8x32xf32>, vector<32x128xf32>, vector<8x128xf32> -> vector<8x128xf32>
    %c0_103 = arith.constant 0 : index
    %c0_104 = arith.constant 0 : index
    %187 = vector.load %arg21[%c0_103, %c0_104] : memref<1x128xf32, #tpu.memory_space<vmem>>, vector<1x128xf32>
    %188 = vector.broadcast %187 : vector<1x128xf32> to vector<8x128xf32>
    %189 = arith.addf %186, %188 : vector<8x128xf32>
    %190 = arith.addf %183, %189 : vector<8x128xf32>
    %c0_105 = arith.constant 0 : index
    %c0_106 = arith.constant 0 : index
    %191 = vector.load %arg24[%c0_105, %c0_106] : memref<8x128xf32, #tpu.memory_space<vmem>>, vector<8x128xf32>
    tpu.vector_store %arg24[%c0_105, %c0_106], %190 {strides = array<i32>} : memref<8x128xf32, #tpu.memory_space<vmem>>, vector<8x128xf32>,
    return
  }
  func.func @transform_0(%arg0: i32) -> (i32, i32) {
    %c0_i32 = arith.constant 0 : i32
    %c0_i32_0 = arith.constant 0 : i32
    return %arg0, %c0_i32 : i32, i32
  }
  func.func @transform_1(%arg0: i32) -> (i32, i32) {
    %c0_i32 = arith.constant 0 : i32
    %c0_i32_0 = arith.constant 0 : i32
    return %arg0, %c0_i32 : i32, i32
  }
  func.func @transform_2(%arg0: i32) -> (i32, i32) {
    %c0_i32 = arith.constant 0 : i32
    %c0_i32_0 = arith.constant 0 : i32
    return %arg0, %c0_i32 : i32, i32
  }
  func.func @transform_3(%arg0: i32) -> (i32, i32) {
    %c0_i32 = arith.constant 0 : i32
    %c0_i32_0 = arith.constant 0 : i32
    %c0_i32_1 = arith.constant 0 : i32
    return %c0_i32, %c0_i32_0 : i32, i32
  }
  func.func @transform_4(%arg0: i32) -> (i32, i32) {
    %c0_i32 = arith.constant 0 : i32
    %c0_i32_0 = arith.constant 0 : i32
    %c0_i32_1 = arith.constant 0 : i32
    return %c0_i32, %c0_i32_0 : i32, i32
  }
  func.func @transform_5(%arg0: i32) -> (i32, i32, i32) {
    %c0_i32 = arith.constant 0 : i32
    %c0_i32_0 = arith.constant 0 : i32
    %c0_i32_1 = arith.constant 0 : i32
    %c0_i32_2 = arith.constant 0 : i32
    return %c0_i32, %c0_i32_0, %c0_i32_1 : i32, i32, i32
  }
  func.func @transform_6(%arg0: i32) -> (i32, i32, i32) {
    %c0_i32 = arith.constant 0 : i32
    %c0_i32_0 = arith.constant 0 : i32
    %c0_i32_1 = arith.constant 0 : i32
    %c0_i32_2 = arith.constant 0 : i32
    return %c0_i32, %c0_i32_0, %c0_i32_1 : i32, i32, i32
  }
  func.func @transform_7(%arg0: i32) -> (i32, i32, i32) {
    %c0_i32 = arith.constant 0 : i32
    %c0_i32_0 = arith.constant 0 : i32
    %c0_i32_1 = arith.constant 0 : i32
    %c0_i32_2 = arith.constant 0 : i32
    return %c0_i32, %c0_i32_0, %c0_i32_1 : i32, i32, i32
  }
  func.func @transform_8(%arg0: i32) -> (i32, i32, i32) {
    %c0_i32 = arith.constant 0 : i32
    %c0_i32_0 = arith.constant 0 : i32
    %c0_i32_1 = arith.constant 0 : i32
    %c0_i32_2 = arith.constant 0 : i32
    return %c0_i32, %c0_i32_0, %c0_i32_1 : i32, i32, i32
  }
  func.func @transform_9(%arg0: i32) -> (i32, i32, i32) {
    %c0_i32 = arith.constant 0 : i32
    %c0_i32_0 = arith.constant 0 : i32
    %c0_i32_1 = arith.constant 0 : i32
    %c0_i32_2 = arith.constant 0 : i32
    return %c0_i32, %c0_i32_0, %c0_i32_1 : i32, i32, i32
  }
  func.func @transform_10(%arg0: i32) -> (i32, i32, i32) {
    %c0_i32 = arith.constant 0 : i32
    %c0_i32_0 = arith.constant 0 : i32
    %c0_i32_1 = arith.constant 0 : i32
    %c0_i32_2 = arith.constant 0 : i32
    return %c0_i32, %c0_i32_0, %c0_i32_1 : i32, i32, i32
  }
  func.func @transform_11(%arg0: i32) -> (i32, i32) {
    %c0_i32 = arith.constant 0 : i32
    %c0_i32_0 = arith.constant 0 : i32
    %c0_i32_1 = arith.constant 0 : i32
    return %c0_i32, %c0_i32_0 : i32, i32
  }
  func.func @transform_12(%arg0: i32) -> (i32, i32) {
    %c0_i32 = arith.constant 0 : i32
    %c0_i32_0 = arith.constant 0 : i32
    %c0_i32_1 = arith.constant 0 : i32
    return %c0_i32, %c0_i32_0 : i32, i32
  }
  func.func @transform_13(%arg0: i32) -> (i32, i32) {
    %c0_i32 = arith.constant 0 : i32
    %c0_i32_0 = arith.constant 0 : i32
    %c0_i32_1 = arith.constant 0 : i32
    return %c0_i32, %c0_i32_0 : i32, i32
  }
  func.func @transform_14(%arg0: i32) -> (i32, i32) {
    %c0_i32 = arith.constant 0 : i32
    %c0_i32_0 = arith.constant 0 : i32
    %c0_i32_1 = arith.constant 0 : i32
    return %c0_i32, %c0_i32_0 : i32, i32
  }
  func.func @transform_15(%arg0: i32) -> (i32, i32) {
    %c0_i32 = arith.constant 0 : i32
    %c0_i32_0 = arith.constant 0 : i32
    %c0_i32_1 = arith.constant 0 : i32
    return %c0_i32, %c0_i32_0 : i32, i32
  }
  func.func @transform_16(%arg0: i32) -> (i32, i32) {
    %c0_i32 = arith.constant 0 : i32
    %c0_i32_0 = arith.constant 0 : i32
    %c0_i32_1 = arith.constant 0 : i32
    return %c0_i32, %c0_i32_0 : i32, i32
  }
  func.func @transform_17(%arg0: i32) -> (i32, i32) {
    %c0_i32 = arith.constant 0 : i32
    %c0_i32_0 = arith.constant 0 : i32
    %c0_i32_1 = arith.constant 0 : i32
    return %c0_i32, %c0_i32_0 : i32, i32
  }
  func.func @transform_18(%arg0: i32) -> (i32, i32) {
    %c0_i32 = arith.constant 0 : i32
    %c0_i32_0 = arith.constant 0 : i32
    %c0_i32_1 = arith.constant 0 : i32
    return %c0_i32, %c0_i32_0 : i32, i32
  }
  func.func @transform_19(%arg0: i32) -> (i32, i32) {
    %c0_i32 = arith.constant 0 : i32
    %c0_i32_0 = arith.constant 0 : i32
    %c0_i32_1 = arith.constant 0 : i32
    return %c0_i32, %c0_i32_0 : i32, i32
  }
  func.func @transform_20(%arg0: i32) -> (i32, i32) {
    %c0_i32 = arith.constant 0 : i32
    %c0_i32_0 = arith.constant 0 : i32
    %c0_i32_1 = arith.constant 0 : i32
    return %c0_i32, %c0_i32_0 : i32, i32
  }
  func.func @transform_21(%arg0: i32) -> (i32, i32) {
    %c0_i32 = arith.constant 0 : i32
    %c0_i32_0 = arith.constant 0 : i32
    return %arg0, %c0_i32 : i32, i32
  }
  func.func @transform_22(%arg0: i32) -> (i32, i32) {
    %c0_i32 = arith.constant 0 : i32
    %c0_i32_0 = arith.constant 0 : i32
    return %arg0, %c0_i32 : i32, i32
  }
  func.func @transform_23(%arg0: i32) -> (i32, i32) {
    %c0_i32 = arith.constant 0 : i32
    %c0_i32_0 = arith.constant 0 : i32
    return %arg0, %c0_i32 : i32, i32
  }
}

</mosaic_0001>

<llo_original>
// kernel: tpu_custom_call.1
$region0: #{tpu_custom_call.1}
  #allocation0 [shape = 'u32[]', space=smem, size = 0x4, offset = 0x4, fixed_abs, tag = 'smem constant byte address 0x4 - core index']
  #allocation1 [shape = 'u32[144,128]{1,0:T(1,128)}', space=vmem, size = 0x12000, scoped, tag = 'internal scratch']
  %s0 = inlined_call_operand.hbm [shape: f32[8,32], index: 0, kind: input, shape index: {}]
  %s1 = inlined_call_operand.hbm [shape: f32[8,16], index: 1, kind: input, shape index: {}]
  %s2 = inlined_call_operand.hbm [shape: f32[8,128], index: 2, kind: input, shape index: {}]
  %s3 = inlined_call_operand.hbm [shape: f32[32,32], index: 3, kind: input, shape index: {}]
  %s4 = inlined_call_operand.hbm [shape: f32[1,32], index: 4, kind: input, shape index: {}]
  %s5 = inlined_call_operand.vmem [shape: f32[2,32,32], index: 5, kind: input, shape index: {}]
  %s6 = inlined_call_operand.vmem [shape: f32[2,1,32], index: 6, kind: input, shape index: {}]
  %s7 = inlined_call_operand.vmem [shape: f32[2,1,32], index: 7, kind: input, shape index: {}]
  %s8 = inlined_call_operand.vmem [shape: f32[2,32,32], index: 8, kind: input, shape index: {}]
  %s9 = inlined_call_operand.hbm [shape: f32[2,1,32], index: 9, kind: input, shape index: {}]
  %s10 = inlined_call_operand.hbm [shape: f32[2,1,32], index: 10, kind: input, shape index: {}]
  %s11 = inlined_call_operand.vmem [shape: f32[16,384], index: 11, kind: input, shape index: {}]
  %s12 = inlined_call_operand.vmem [shape: f32[1,384], index: 12, kind: input, shape index: {}]
  %s13 = inlined_call_operand.hbm [shape: f32[32,128], index: 13, kind: input, shape index: {}]
  %s14 = inlined_call_operand.vmem [shape: f32[1,128], index: 14, kind: input, shape index: {}]
  %s15 = inlined_call_operand.vmem [shape: f32[128,32], index: 15, kind: input, shape index: {}]
  %s16 = inlined_call_operand.vmem [shape: f32[1,32], index: 16, kind: input, shape index: {}]
  %s17 = inlined_call_operand.hbm [shape: f32[32,128], index: 17, kind: input, shape index: {}]
  %s18 = inlined_call_operand.vmem [shape: f32[1,128], index: 18, kind: input, shape index: {}]
  %s19 = inlined_call_operand.hbm [shape: f32[32,128], index: 19, kind: input, shape index: {}]
  %s20 = inlined_call_operand.vmem [shape: f32[1,128], index: 20, kind: input, shape index: {}]
  %s21 = inlined_call_operand.hbm [shape: f32[8,128], index: 21, kind: output, shape index: {0}]
  %s22 = inlined_call_operand.hbm [shape: s32[8,128], index: 22, kind: output, shape index: {1}]
  %s23 = inlined_call_operand.hbm [shape: f32[8,128], index: 23, kind: output, shape index: {2}]
  %24 = xla_tuple %s21, %s22, %s23
  %s25 = sld [smem:[#allocation0]]
  $region150: #{tpu_custom_call.1} parent=0
    _
  %s27 = ssub.s32 1, %s25
  %s28 = scalar_select 0, %s27, %s25
  $region1: #{tpu_custom_call.1} parent=0
    #allocation2 [shape = 'u8[4096]{0}', space=vmem, size = 0x1000, scoped, tag = 'input window, operand 0, single buffered']
    #allocation3 [shape = 's32[1]{0}', space=sflag, size = 0x4, scoped, tag = 'scoped memory for tpu_custom_call.1']
    #allocation4 [shape = 's32[1]{0}', space=sflag, size = 0x4, scoped, tag = 'scoped memory for tpu_custom_call.1']
    #allocation5 [shape = 'u8[4096]{0}', space=vmem, size = 0x1000, scoped, tag = 'input window, operand 1, single buffered']
    #allocation6 [shape = 's32[1]{0}', space=sflag, size = 0x4, scoped, tag = 'scoped memory for tpu_custom_call.1']
    #allocation7 [shape = 'u8[4096]{0}', space=vmem, size = 0x1000, scoped, tag = 'input window, operand 2, single buffered']
    #allocation8 [shape = 'u8[16384]{0}', space=vmem, size = 0x4000, scoped, tag = 'input window, operand 3, single buffered']
    #allocation9 [shape = 's32[1]{0}', space=sflag, size = 0x4, scoped, tag = 'scoped memory for tpu_custom_call.1']
    #allocation10 [shape = 'u8[512]{0}', space=vmem, size = 0x400, scoped, tag = 'input window, operand 4, single buffered']
    #allocation11 [shape = 'u8[1024]{0}', space=vmem, size = 0x400, scoped, tag = 'input window, operand 9, single buffered']
    #allocation12 [shape = 's32[1]{0}', space=sflag, size = 0x4, scoped, tag = 'scoped memory for tpu_custom_call.1']
    #allocation13 [shape = 'u8[1024]{0}', space=vmem, size = 0x400, scoped, tag = 'input window, operand 10, single buffered']
    #allocation14 [shape = 'u8[16384]{0}', space=vmem, size = 0x4000, scoped, tag = 'input window, operand 13, single buffered']
    #allocation15 [shape = 's32[1]{0}', space=sflag, size = 0x4, scoped, tag = 'scoped memory for tpu_custom_call.1']
    #allocation16 [shape = 'u8[16384]{0}', space=vmem, size = 0x4000, scoped, tag = 'input window, operand 17, single buffered']
    #allocation17 [shape = 'u8[16384]{0}', space=vmem, size = 0x4000, scoped, tag = 'input window, operand 19, single buffered']
    #allocation18 [shape = 's32[1]{0}', space=sflag, size = 0x4, scoped, tag = 'scoped memory for tpu_custom_call.1']
    #allocation19 [shape = 'u8[4096]{0}', space=vmem, size = 0x1000, scoped, tag = 'output window, operand 0, single buffered']
    #allocation20 [shape = 'u8[4096]{0}', space=vmem, size = 0x1000, scoped, tag = 'output window, operand 1, single buffered']
    #allocation21 [shape = 's32[1]{0}', space=sflag, size = 0x4, scoped, tag = 'scoped memory for tpu_custom_call.1']
    #allocation22 [shape = 'u8[4096]{0}', space=vmem, size = 0x1000, scoped, tag = 'output window, operand 2, single buffered']
    %29 = vsyncpa [#allocation3], 0
    %30 = vsyncpa [#allocation6], 0
    %31 = vsyncpa [#allocation9], 0
    %32 = vsyncpa [#allocation12], 0
    %33 = vsyncpa [#allocation15], 0
    %34 = vsyncpa [#allocation18], 0
    %35 = vsyncpa [#allocation4], 0
    %36 = vsyncpa [#allocation21], 0
    // Predicated region
    $region2: #{tpu_custom_call.1} parent=1 // pred_check
      _
    $region3: #{tpu_custom_call.1} parent=1 // pred_check_branch
      %38 = sbr.rel (0) target = $region5
    $region4: #{tpu_custom_call.1} parent=1 // pred_region
      %s40 = ssub.s32 128, 128
      %41 = vsyncadd [#allocation3], %s40
      %s43 = sshll.u32 [#allocation2], 4
      %s44 = int_to_ptr.vmem [resolvable:$true] %s43
      %46 = dma.hbm_to_vmem [thread:$0]  %s0, 128, %s44, [#allocation3]
    $region5: #{tpu_custom_call.1} parent=1 // pred_fallthru
      _
    // Predicated region
    $region6: #{tpu_custom_call.1} parent=1 // pred_check
      _
    $region7: #{tpu_custom_call.1} parent=1 // pred_check_branch
      %48 = sbr.rel (0) target = $region9
    $region8: #{tpu_custom_call.1} parent=1 // pred_region
      %s50 = ssub.s32 128, 128
      %51 = vsyncadd [#allocation6], %s50
      %s53 = sshll.u32 [#allocation5], 4
      %s54 = int_to_ptr.vmem [resolvable:$true] %s53
      %56 = dma.hbm_to_vmem [thread:$0]  %s1, 128, %s54, [#allocation6]
    $region9: #{tpu_custom_call.1} parent=1 // pred_fallthru
      _
    // Predicated region
    $region10: #{tpu_custom_call.1} parent=1 // pred_check
      _
    $region11: #{tpu_custom_call.1} parent=1 // pred_check_branch
      %58 = sbr.rel (0) target = $region13
    $region12: #{tpu_custom_call.1} parent=1 // pred_region
      %s60 = ssub.s32 128, 128
      %61 = vsyncadd [#allocation6], %s60
      %s63 = sshll.u32 [#allocation7], 4
      %s64 = int_to_ptr.vmem [resolvable:$true] %s63
      %66 = dma.hbm_to_vmem [thread:$0]  %s2, 128, %s64, [#allocation6]
    $region13: #{tpu_custom_call.1} parent=1 // pred_fallthru
      _
    // Predicated region
    $region14: #{tpu_custom_call.1} parent=1 // pred_check
      _
    $region15: #{tpu_custom_call.1} parent=1 // pred_check_branch
      %68 = sbr.rel (0) target = $region17
    $region16: #{tpu_custom_call.1} parent=1 // pred_region
      %s70 = ssub.s32 512, 512
      %71 = vsyncadd [#allocation9], %s70
      %s72 = sshll.u32 [#allocation8], 4
      %s73 = int_to_ptr.vmem [resolvable:$true] %s72
      %78 = dma.hbm_to_vmem [thread:$0]  %s3, 512, %s73, [#allocation9], 128, 128, 8
    $region17: #{tpu_custom_call.1} parent=1 // pred_fallthru
      _
    // Predicated region
    $region18: #{tpu_custom_call.1} parent=1 // pred_check
      _
    $region19: #{tpu_custom_call.1} parent=1 // pred_check_branch
      %80 = sbr.rel (0) target = $region21
    $region20: #{tpu_custom_call.1} parent=1 // pred_region
      %s82 = ssub.s32 16, 16
      %83 = vsyncadd [#allocation9], %s82
      %s85 = sshll.u32 [#allocation10], 4
      %s86 = int_to_ptr.vmem [resolvable:$true] %s85
      %88 = dma.hbm_to_vmem [thread:$0]  %s4, 16, %s86, [#allocation9]
    $region21: #{tpu_custom_call.1} parent=1 // pred_fallthru
      _
    // Predicated region
    $region22: #{tpu_custom_call.1} parent=1 // pred_check
      _
    $region23: #{tpu_custom_call.1} parent=1 // pred_check_branch
      %90 = sbr.rel (0) target = $region25
    $region24: #{tpu_custom_call.1} parent=1 // pred_region
      _
    $region25: #{tpu_custom_call.1} parent=1 // pred_fallthru
      _
    // Predicated region
    $region26: #{tpu_custom_call.1} parent=1 // pred_check
      _
    $region27: #{tpu_custom_call.1} parent=1 // pred_check_branch
      %92 = sbr.rel (0) target = $region29
    $region28: #{tpu_custom_call.1} parent=1 // pred_region
      _
    $region29: #{tpu_custom_call.1} parent=1 // pred_fallthru
      _
    // Predicated region
    $region30: #{tpu_custom_call.1} parent=1 // pred_check
      _
    $region31: #{tpu_custom_call.1} parent=1 // pred_check_branch
      %94 = sbr.rel (0) target = $region33
    $region32: #{tpu_custom_call.1} parent=1 // pred_region
      _
    $region33: #{tpu_custom_call.1} parent=1 // pred_fallthru
      _
    // Predicated region
    $region34: #{tpu_custom_call.1} parent=1 // pred_check
      _
    $region35: #{tpu_custom_call.1} parent=1 // pred_check_branch
      %96 = sbr.rel (0) target = $region37
    $region36: #{tpu_custom_call.1} parent=1 // pred_region
      _
    $region37: #{tpu_custom_call.1} parent=1 // pred_fallthru
      _
    // Predicated region
    $region38: #{tpu_custom_call.1} parent=1 // pred_check
      _
    $region39: #{tpu_custom_call.1} parent=1 // pred_check_branch
      %98 = sbr.rel (0) target = $region41
    $region40: #{tpu_custom_call.1} parent=1 // pred_region
      %s100 = ssub.s32 32, 32
      %101 = vsyncadd [#allocation12], %s100
      %s102 = sshll.u32 [#allocation11], 4
      %s103 = int_to_ptr.vmem [resolvable:$true] %s102
      %108 = dma.hbm_to_vmem [thread:$0]  %s9, 32, %s103, [#allocation12], 16, 16, 1
    $region41: #{tpu_custom_call.1} parent=1 // pred_fallthru
      _
    // Predicated region
    $region42: #{tpu_custom_call.1} parent=1 // pred_check
      _
    $region43: #{tpu_custom_call.1} parent=1 // pred_check_branch
      %110 = sbr.rel (0) target = $region45
    $region44: #{tpu_custom_call.1} parent=1 // pred_region
      %s112 = ssub.s32 32, 32
      %113 = vsyncadd [#allocation12], %s112
      %s114 = sshll.u32 [#allocation13], 4
      %s115 = int_to_ptr.vmem [resolvable:$true] %s114
      %120 = dma.hbm_to_vmem [thread:$0]  %s10, 32, %s115, [#allocation12], 16, 16, 1
    $region45: #{tpu_custom_call.1} parent=1 // pred_fallthru
      _
    // Predicated region
    $region46: #{tpu_custom_call.1} parent=1 // pred_check
      _
    $region47: #{tpu_custom_call.1} parent=1 // pred_check_branch
      %122 = sbr.rel (0) target = $region49
    $region48: #{tpu_custom_call.1} parent=1 // pred_region
      _
    $region49: #{tpu_custom_call.1} parent=1 // pred_fallthru
      _
    // Predicated region
    $region50: #{tpu_custom_call.1} parent=1 // pred_check
      _
    $region51: #{tpu_custom_call.1} parent=1 // pred_check_branch
      %124 = sbr.rel (0) target = $region53
    $region52: #{tpu_custom_call.1} parent=1 // pred_region
      _
    $region53: #{tpu_custom_call.1} parent=1 // pred_fallthru
      _
    // Predicated region
    $region54: #{tpu_custom_call.1} parent=1 // pred_check
      _
    $region55: #{tpu_custom_call.1} parent=1 // pred_check_branch
      %126 = sbr.rel (0) target = $region57
    $region56: #{tpu_custom_call.1} parent=1 // pred_region
      %s128 = ssub.s32 512, 512
      %129 = vsyncadd [#allocation15], %s128
      %s130 = sshll.u32 [#allocation14], 4
      %s131 = int_to_ptr.vmem [resolvable:$true] %s130
      %136 = dma.hbm_to_vmem [thread:$0]  %s13, 512, %s131, [#allocation15], 128, 128, 8
    $region57: #{tpu_custom_call.1} parent=1 // pred_fallthru
      _
    // Predicated region
    $region58: #{tpu_custom_call.1} parent=1 // pred_check
      _
    $region59: #{tpu_custom_call.1} parent=1 // pred_check_branch
      %138 = sbr.rel (0) target = $region61
    $region60: #{tpu_custom_call.1} parent=1 // pred_region
      _
    $region61: #{tpu_custom_call.1} parent=1 // pred_fallthru
      _
    // Predicated region
    $region62: #{tpu_custom_call.1} parent=1 // pred_check
      _
    $region63: #{tpu_custom_call.1} parent=1 // pred_check_branch
      %140 = sbr.rel (0) target = $region65
    $region64: #{tpu_custom_call.1} parent=1 // pred_region
      _
    $region65: #{tpu_custom_call.1} parent=1 // pred_fallthru
      _
    // Predicated region
    $region66: #{tpu_custom_call.1} parent=1 // pred_check
      _
    $region67: #{tpu_custom_call.1} parent=1 // pred_check_branch
      %142 = sbr.rel (0) target = $region69
    $region68: #{tpu_custom_call.1} parent=1 // pred_region
      _
    $region69: #{tpu_custom_call.1} parent=1 // pred_fallthru
      _
    // Predicated region
    $region70: #{tpu_custom_call.1} parent=1 // pred_check
      _
    $region71: #{tpu_custom_call.1} parent=1 // pred_check_branch
      %144 = sbr.rel (0) target = $region73
    $region72: #{tpu_custom_call.1} parent=1 // pred_region
      %s146 = ssub.s32 512, 512
      %147 = vsyncadd [#allocation15], %s146
      %s148 = sshll.u32 [#allocation16], 4
      %s149 = int_to_ptr.vmem [resolvable:$true] %s148
      %154 = dma.hbm_to_vmem [thread:$0]  %s17, 512, %s149, [#allocation15], 128, 128, 8
    $region73: #{tpu_custom_call.1} parent=1 // pred_fallthru
      _
    // Predicated region
    $region74: #{tpu_custom_call.1} parent=1 // pred_check
      _
    $region75: #{tpu_custom_call.1} parent=1 // pred_check_branch
      %156 = sbr.rel (0) target = $region77
    $region76: #{tpu_custom_call.1} parent=1 // pred_region
      _
    $region77: #{tpu_custom_call.1} parent=1 // pred_fallthru
      _
    // Predicated region
    $region78: #{tpu_custom_call.1} parent=1 // pred_check
      _
    $region79: #{tpu_custom_call.1} parent=1 // pred_check_branch
      %158 = sbr.rel (0) target = $region81
    $region80: #{tpu_custom_call.1} parent=1 // pred_region
      %s160 = ssub.s32 512, 512
      %161 = vsyncadd [#allocation18], %s160
      %s162 = sshll.u32 [#allocation17], 4
      %s163 = int_to_ptr.vmem [resolvable:$true] %s162
      %168 = dma.hbm_to_vmem [thread:$0]  %s19, 512, %s163, [#allocation18], 128, 128, 8
    $region81: #{tpu_custom_call.1} parent=1 // pred_fallthru
      _
    // Predicated region
    $region82: #{tpu_custom_call.1} parent=1 // pred_check
      _
    $region83: #{tpu_custom_call.1} parent=1 // pred_check_branch
      %170 = sbr.rel (0) target = $region85
    $region84: #{tpu_custom_call.1} parent=1 // pred_region
      _
    $region85: #{tpu_custom_call.1} parent=1 // pred_fallthru
      _
    // Predicated region
    $region86: #{tpu_custom_call.1} parent=1 // pred_check
      _
    $region87: #{tpu_custom_call.1} parent=1 // pred_check_branch
      %172 = sbr.rel (0) target = $region89
    $region88: #{tpu_custom_call.1} parent=1 // pred_region
      %173 = dma.done [#allocation3], 128
    $region89: #{tpu_custom_call.1} parent=1 // pred_fallthru
      _
    // Predicated region
    $region90: #{tpu_custom_call.1} parent=1 // pred_check
      _
    $region91: #{tpu_custom_call.1} parent=1 // pred_check_branch
      %175 = sbr.rel (0) target = $region93
    $region92: #{tpu_custom_call.1} parent=1 // pred_region
      %176 = dma.done [#allocation6], 128
    $region93: #{tpu_custom_call.1} parent=1 // pred_fallthru
      _
    // Predicated region
    $region94: #{tpu_custom_call.1} parent=1 // pred_check
      _
    $region95: #{tpu_custom_call.1} parent=1 // pred_check_branch
      %178 = sbr.rel (0) target = $region97
    $region96: #{tpu_custom_call.1} parent=1 // pred_region
      %179 = dma.done [#allocation6], 128
    $region97: #{tpu_custom_call.1} parent=1 // pred_fallthru
      _
    // Predicated region
    $region98: #{tpu_custom_call.1} parent=1 // pred_check
      _
    $region99: #{tpu_custom_call.1} parent=1 // pred_check_branch
      %181 = sbr.rel (0) target = $region101
    $region100: #{tpu_custom_call.1} parent=1 // pred_region
      %182 = dma.done [#allocation9], 512
    $region101: #{tpu_custom_call.1} parent=1 // pred_fallthru
      _
    // Predicated region
    $region102: #{tpu_custom_call.1} parent=1 // pred_check
      _
    $region103: #{tpu_custom_call.1} parent=1 // pred_check_branch
      %184 = sbr.rel (0) target = $region105
    $region104: #{tpu_custom_call.1} parent=1 // pred_region
      %185 = dma.done [#allocation9], 16
    $region105: #{tpu_custom_call.1} parent=1 // pred_fallthru
      _
    // Predicated region
    $region106: #{tpu_custom_call.1} parent=1 // pred_check
      _
    $region107: #{tpu_custom_call.1} parent=1 // pred_check_branch
      %187 = sbr.rel (0) target = $region109
    $region108: #{tpu_custom_call.1} parent=1 // pred_region
      %188 = dma.done [#allocation12], 32
    $region109: #{tpu_custom_call.1} parent=1 // pred_fallthru
      _
    // Predicated region
    $region110: #{tpu_custom_call.1} parent=1 // pred_check
      _
    $region111: #{tpu_custom_call.1} parent=1 // pred_check_branch
      %190 = sbr.rel (0) target = $region113
    $region112: #{tpu_custom_call.1} parent=1 // pred_region
      %191 = dma.done [#allocation12], 32
    $region113: #{tpu_custom_call.1} parent=1 // pred_fallthru
      _
    // Predicated region
    $region114: #{tpu_custom_call.1} parent=1 // pred_check
      _
    $region115: #{tpu_custom_call.1} parent=1 // pred_check_branch
      %193 = sbr.rel (0) target = $region117
    $region116: #{tpu_custom_call.1} parent=1 // pred_region
      %194 = dma.done [#allocation15], 512
    $region117: #{tpu_custom_call.1} parent=1 // pred_fallthru
      _
    // Predicated region
    $region118: #{tpu_custom_call.1} parent=1 // pred_check
      _
    $region119: #{tpu_custom_call.1} parent=1 // pred_check_branch
      %196 = sbr.rel (0) target = $region121
    $region120: #{tpu_custom_call.1} parent=1 // pred_region
      %197 = dma.done [#allocation15], 512
    $region121: #{tpu_custom_call.1} parent=1 // pred_fallthru
      _
    // Predicated region
    $region122: #{tpu_custom_call.1} parent=1 // pred_check
      _
    $region123: #{tpu_custom_call.1} parent=1 // pred_check_branch
      %199 = sbr.rel (0) target = $region125
    $region124: #{tpu_custom_call.1} parent=1 // pred_region
      %200 = dma.done [#allocation18], 512
    $region125: #{tpu_custom_call.1} parent=1 // pred_fallthru
      _
    %v201 = vld [vmem:[#allocation2] sm:$0xff]
    %v202 = vld [vmem:[#allocation5] sm:$0xff]
    %v203 = vld [vmem:[#allocation8] sm:$0xff]
    %v204 = vld [vmem:[#allocation8 + $0x8] sm:$0xff]
    %v205 = vld [vmem:[#allocation8 + $0x10] sm:$0xff]
    %v206 = vld [vmem:[#allocation8 + $0x18] sm:$0xff]
    %v207 = vld [vmem:[#allocation10] sm:$0x1]
    %v209 = vlaneseq
    %v210 = vshrl.u32 %v209, 7
    %v211 = vsub.s32 0, %v210
    %v212 = vrot.slane %v207, %v211
    %vm214 = vcmask 261120
    %v216 = vsel %vm214, %v201, 0
    %218 = vmatprep.subr.mxu0 0.0
    %219 = vmatpush1.msra.mxu0 %v203
    %220 = vmatprep.subr.mxu0 0.0
    %221 = vmatpush1.msra.mxu0 %v204
    %222 = vmatprep.subr.mxu0 0.0
    %223 = vmatpush1.msra.mxu0 %v205
    %224 = vmatprep.subr.mxu0 0.0
    %225 = vmatpush1.msra.mxu0 %v206
    %226 = vmatprep.subr.mxu0 0.0
    %227 = vmatpush1.msra.mxu0 0.0
    %228 = vmatprep.subr.mxu0 0.0
    %229 = vmatpush1.msra.mxu0 0.0
    %230 = vmatprep.subr.mxu0 0.0
    %231 = vmatpush1.msra.mxu0 0.0
    %232 = vmatprep.subr.mxu0 0.0
    %233 = vmatpush1.msra.mxu0 0.0
    %234 = vmatprep.subr.mxu0 0.0
    %235 = vmatpush1.msra.mxu0 0.0
    %236 = vmatprep.subr.mxu0 0.0
    %237 = vmatpush1.msra.mxu0 0.0
    %238 = vmatprep.subr.mxu0 0.0
    %239 = vmatpush1.msra.mxu0 0.0
    %240 = vmatprep.subr.mxu0 0.0
    %241 = vmatpush1.msra.mxu0 0.0
    %242 = vmatprep.subr.mxu0 0.0
    %243 = vmatpush1.msra.mxu0 0.0
    %244 = vmatprep.subr.mxu0 0.0
    %245 = vmatpush1.msra.mxu0 0.0
    %246 = vmatprep.subr.mxu0 0.0
    %247 = vmatpush1.msra.mxu0 0.0
    %248 = vmatprep.subr.mxu0 0.0
    %249 = vmatpush1.msra.mxu0 0.0
    %250 = vmatprep.subr.mxu0 0.0
    %251 = vmatpush1.msra.mxu0 0.0
    %252 = vmatprep.subr.mxu0 0.0
    %253 = vmatpush1.msra.mxu0 0.0
    %254 = vmatprep.subr.mxu0 0.0
    %255 = vmatpush1.msra.mxu0 0.0
    %256 = vmatprep.subr.mxu0 0.0
    %257 = vmatpush1.msra.mxu0 0.0
    %258 = vmatprep.subr.mxu0 0.0
    %259 = vmatpush1.msra.mxu0 0.0
    %260 = vmatprep.subr.mxu0 0.0
    %261 = vmatpush1.msra.mxu0 0.0
    %262 = vmatprep.subr.mxu0 0.0
    %263 = vmatpush1.msra.mxu0 0.0
    %264 = vmatprep.subr.mxu0 0.0
    %265 = vmatpush1.msra.mxu0 0.0
    %266 = vmatprep.subr.mxu0 0.0
    %267 = vmatpush1.msra.mxu0 0.0
    %268 = vmatprep.subr.mxu0 0.0
    %269 = vmatpush1.msra.mxu0 0.0
    %270 = vmatprep.subr.mxu0 0.0
    %271 = vmatpush1.msra.mxu0 0.0
    %272 = vmatprep.subr.mxu0 0.0
    %273 = vmatpush1.msra.mxu0 0.0
    %274 = vmatprep.subr.mxu0 0.0
    %275 = vmatpush1.msra.mxu0 0.0
    %276 = vmatprep.subr.mxu0 0.0
    %277 = vmatpush1.msra.mxu0 0.0
    %278 = vmatprep.subr.mxu0 0.0
    %279 = vmatpush1.msra.mxu0 0.0
    %280 = vmatprep.subr.mxu0 0.0
    %281 = vmatpush1.msra.mxu0 0.0
    %282 = vmatprep.mubr.f32.mxu0 0.0
    %283 = vmatmul.mubr.f32.gmra.mrb[0].mxu0 %v216
    %v284 = vpop.f32.mrb[0].mxu0
    %v285 = vadd.f32 %v212, %v284
    %v286 = vpop.f32.mrb[0].mxu0
    %287 = vdwg.mxu0
    %v288 = vld [vmem:[%s5] sm:$0xff]
    %v289 = vld [vmem:[%s5 + $0x8] sm:$0xff]
    %v290 = vld [vmem:[%s5 + $0x10] sm:$0xff]
    %v291 = vld [vmem:[%s5 + $0x18] sm:$0xff]
    %v293 = vsel %vm214, %v285, 0
    %295 = vmatprep.subr.mxu0 0.0
    %296 = vmatpush1.msra.mxu0 %v288
    %297 = vmatprep.subr.mxu0 0.0
    %298 = vmatpush1.msra.mxu0 %v289
    %299 = vmatprep.subr.mxu0 0.0
    %300 = vmatpush1.msra.mxu0 %v290
    %301 = vmatprep.subr.mxu0 0.0
    %302 = vmatpush1.msra.mxu0 %v291
    %303 = vmatprep.subr.mxu0 0.0
    %304 = vmatpush1.msra.mxu0 0.0
    %305 = vmatprep.subr.mxu0 0.0
    %306 = vmatpush1.msra.mxu0 0.0
    %307 = vmatprep.subr.mxu0 0.0
    %308 = vmatpush1.msra.mxu0 0.0
    %309 = vmatprep.subr.mxu0 0.0
    %310 = vmatpush1.msra.mxu0 0.0
    %311 = vmatprep.subr.mxu0 0.0
    %312 = vmatpush1.msra.mxu0 0.0
    %313 = vmatprep.subr.mxu0 0.0
    %314 = vmatpush1.msra.mxu0 0.0
    %315 = vmatprep.subr.mxu0 0.0
    %316 = vmatpush1.msra.mxu0 0.0
    %317 = vmatprep.subr.mxu0 0.0
    %318 = vmatpush1.msra.mxu0 0.0
    %319 = vmatprep.subr.mxu0 0.0
    %320 = vmatpush1.msra.mxu0 0.0
    %321 = vmatprep.subr.mxu0 0.0
    %322 = vmatpush1.msra.mxu0 0.0
    %323 = vmatprep.subr.mxu0 0.0
    %324 = vmatpush1.msra.mxu0 0.0
    %325 = vmatprep.subr.mxu0 0.0
    %326 = vmatpush1.msra.mxu0 0.0
    %327 = vmatprep.subr.mxu0 0.0
    %328 = vmatpush1.msra.mxu0 0.0
    %329 = vmatprep.subr.mxu0 0.0
    %330 = vmatpush1.msra.mxu0 0.0
    %331 = vmatprep.subr.mxu0 0.0
    %332 = vmatpush1.msra.mxu0 0.0
    %333 = vmatprep.subr.mxu0 0.0
    %334 = vmatpush1.msra.mxu0 0.0
    %335 = vmatprep.subr.mxu0 0.0
    %336 = vmatpush1.msra.mxu0 0.0
    %337 = vmatprep.subr.mxu0 0.0
    %338 = vmatpush1.msra.mxu0 0.0
    %339 = vmatprep.subr.mxu0 0.0
    %340 = vmatpush1.msra.mxu0 0.0
    %341 = vmatprep.subr.mxu0 0.0
    %342 = vmatpush1.msra.mxu0 0.0
    %343 = vmatprep.subr.mxu0 0.0
    %344 = vmatpush1.msra.mxu0 0.0
    %345 = vmatprep.subr.mxu0 0.0
    %346 = vmatpush1.msra.mxu0 0.0
    %347 = vmatprep.subr.mxu0 0.0
    %348 = vmatpush1.msra.mxu0 0.0
    %349 = vmatprep.subr.mxu0 0.0
    %350 = vmatpush1.msra.mxu0 0.0
    %351 = vmatprep.subr.mxu0 0.0
    %352 = vmatpush1.msra.mxu0 0.0
    %353 = vmatprep.subr.mxu0 0.0
    %354 = vmatpush1.msra.mxu0 0.0
    %355 = vmatprep.subr.mxu0 0.0
    %356 = vmatpush1.msra.mxu0 0.0
    %357 = vmatprep.subr.mxu0 0.0
    %358 = vmatpush1.msra.mxu0 0.0
    %359 = vmatprep.mubr.f32.mxu0 0.0
    %360 = vmatmul.mubr.f32.gmra.mrb[0].mxu0 %v293
    %v361 = vpop.f32.mrb[0].mxu0
    %v362 = vadd.f32 0.0, %v361
    %v363 = vpop.f32.mrb[0].mxu0
    %364 = vdwg.mxu0
    %v365 = vld [vmem:[%s6] sm:$0x1]
    %v366 = vld [vmem:[%s7] sm:$0x1]
    %v367 = vsel %vm214, %v362, 0.0
    %368 = vadd.xlane.f32.xlu0 %v367
    %v369 = vpop.xlane.xlu0 %368
    %v370 = vmul.f32 %v369, 0.03125
    %v371 = vmul.f32 %v362, %v362
    %v372 = vsel %vm214, %v371, 0.0
    %373 = vadd.xlane.f32.xlu0 %v372
    %v374 = vpop.xlane.xlu0 %373
    %v375 = vmul.f32 %v374, 0.03125
    %v376 = vmul.f32 %v370, %v370
    %v377 = vsub.f32 %v375, %v376
    %v378 = vsub.f32 %v362, %v370
    %v379 = vadd.f32 %v377, 1e-05
    %v380 = vrsqrt.pop %v379
    %v381 = vmul.f32 %v378, %v380
    %v383 = vlaneseq
    %v384 = vshrl.u32 %v383, 7
    %v385 = vsub.s32 0, %v384
    %v386 = vrot.slane %v365, %v385
    %v388 = vmul.f32 %v381, %v386
    %v390 = vlaneseq
    %v391 = vshrl.u32 %v390, 7
    %v392 = vsub.s32 0, %v391
    %v393 = vrot.slane %v366, %v392
    %v395 = vadd.f32 %v388, %v393
    %v396 = vmax.f32 %v395, 0.0
    %v397 = vld [vmem:[%s8] sm:$0xff]
    %v398 = vld [vmem:[%s8 + $0x8] sm:$0xff]
    %v399 = vld [vmem:[%s8 + $0x10] sm:$0xff]
    %v400 = vld [vmem:[%s8 + $0x18] sm:$0xff]
    %v402 = vsel %vm214, %v396, 0
    %404 = vmatprep.subr.mxu0 0.0
    %405 = vmatpush1.msra.mxu0 %v397
    %406 = vmatprep.subr.mxu0 0.0
    %407 = vmatpush1.msra.mxu0 %v398
    %408 = vmatprep.subr.mxu0 0.0
    %409 = vmatpush1.msra.mxu0 %v399
    %410 = vmatprep.subr.mxu0 0.0
    %411 = vmatpush1.msra.mxu0 %v400
    %412 = vmatprep.subr.mxu0 0.0
    %413 = vmatpush1.msra.mxu0 0.0
    %414 = vmatprep.subr.mxu0 0.0
    %415 = vmatpush1.msra.mxu0 0.0
    %416 = vmatprep.subr.mxu0 0.0
    %417 = vmatpush1.msra.mxu0 0.0
    %418 = vmatprep.subr.mxu0 0.0
    %419 = vmatpush1.msra.mxu0 0.0
    %420 = vmatprep.subr.mxu0 0.0
    %421 = vmatpush1.msra.mxu0 0.0
    %422 = vmatprep.subr.mxu0 0.0
    %423 = vmatpush1.msra.mxu0 0.0
    %424 = vmatprep.subr.mxu0 0.0
    %425 = vmatpush1.msra.mxu0 0.0
    %426 = vmatprep.subr.mxu0 0.0
    %427 = vmatpush1.msra.mxu0 0.0
    %428 = vmatprep.subr.mxu0 0.0
    %429 = vmatpush1.msra.mxu0 0.0
    %430 = vmatprep.subr.mxu0 0.0
    %431 = vmatpush1.msra.mxu0 0.0
    %432 = vmatprep.subr.mxu0 0.0
    %433 = vmatpush1.msra.mxu0 0.0
    %434 = vmatprep.subr.mxu0 0.0
    %435 = vmatpush1.msra.mxu0 0.0
    %436 = vmatprep.subr.mxu0 0.0
    %437 = vmatpush1.msra.mxu0 0.0
    %438 = vmatprep.subr.mxu0 0.0
    %439 = vmatpush1.msra.mxu0 0.0
    %440 = vmatprep.subr.mxu0 0.0
    %441 = vmatpush1.msra.mxu0 0.0
    %442 = vmatprep.subr.mxu0 0.0
    %443 = vmatpush1.msra.mxu0 0.0
    %444 = vmatprep.subr.mxu0 0.0
    %445 = vmatpush1.msra.mxu0 0.0
    %446 = vmatprep.subr.mxu0 0.0
    %447 = vmatpush1.msra.mxu0 0.0
    %448 = vmatprep.subr.mxu0 0.0
    %449 = vmatpush1.msra.mxu0 0.0
    %450 = vmatprep.subr.mxu0 0.0
    %451 = vmatpush1.msra.mxu0 0.0
    %452 = vmatprep.subr.mxu0 0.0
    %453 = vmatpush1.msra.mxu0 0.0
    %454 = vmatprep.subr.mxu0 0.0
    %455 = vmatpush1.msra.mxu0 0.0
    %456 = vmatprep.subr.mxu0 0.0
    %457 = vmatpush1.msra.mxu0 0.0
    %458 = vmatprep.subr.mxu0 0.0
    %459 = vmatpush1.msra.mxu0 0.0
    %460 = vmatprep.subr.mxu0 0.0
    %461 = vmatpush1.msra.mxu0 0.0
    %462 = vmatprep.subr.mxu0 0.0
    %463 = vmatpush1.msra.mxu0 0.0
    %464 = vmatprep.subr.mxu0 0.0
    %465 = vmatpush1.msra.mxu0 0.0
    %466 = vmatprep.subr.mxu0 0.0
    %467 = vmatpush1.msra.mxu0 0.0
    %468 = vmatprep.mubr.f32.mxu0 0.0
    %469 = vmatmul.mubr.f32.gmra.mrb[0].mxu0 %v402
    %v470 = vpop.f32.mrb[0].mxu0
    %v471 = vadd.f32 0.0, %v470
    %v472 = vpop.f32.mrb[0].mxu0
    %473 = vdwg.mxu0
    %v474 = vld [vmem:[#allocation11] sm:$0x1]
    %v475 = vld [vmem:[#allocation13] sm:$0x1]
    %v476 = vsel %vm214, %v471, 0.0
    %477 = vadd.xlane.f32.xlu0 %v476
    %v478 = vpop.xlane.xlu0 %477
    %v479 = vmul.f32 %v478, 0.03125
    %v480 = vmul.f32 %v471, %v471
    %v481 = vsel %vm214, %v480, 0.0
    %482 = vadd.xlane.f32.xlu0 %v481
    %v483 = vpop.xlane.xlu0 %482
    %v484 = vmul.f32 %v483, 0.03125
    %v485 = vmul.f32 %v479, %v479
    %v486 = vsub.f32 %v484, %v485
    %v487 = vsub.f32 %v471, %v479
    %v488 = vadd.f32 %v486, 1e-05
    %v489 = vrsqrt.pop %v488
    %v490 = vmul.f32 %v487, %v489
    %v492 = vlaneseq
    %v493 = vshrl.u32 %v492, 7
    %v494 = vsub.s32 0, %v493
    %v495 = vrot.slane %v474, %v494
    %v497 = vmul.f32 %v490, %v495
    %v499 = vlaneseq
    %v500 = vshrl.u32 %v499, 7
    %v501 = vsub.s32 0, %v500
    %v502 = vrot.slane %v475, %v501
    %v504 = vadd.f32 %v497, %v502
    %v505 = vadd.f32 %v504, %v285
    %v506 = vmax.f32 %v505, 0.0
    %s507 = scalar_lea.vmem %s5, 32
    %v508 = vld [vmem:[%s507] sm:$0xff]
    %v509 = vld [vmem:[%s507 + $0x8] sm:$0xff]
    %v510 = vld [vmem:[%s507 + $0x10] sm:$0xff]
    %v511 = vld [vmem:[%s507 + $0x18] sm:$0xff]
    %v513 = vsel %vm214, %v506, 0
    %515 = vmatprep.subr.mxu0 0.0
    %516 = vmatpush1.msra.mxu0 %v508
    %517 = vmatprep.subr.mxu0 0.0
    %518 = vmatpush1.msra.mxu0 %v509
    %519 = vmatprep.subr.mxu0 0.0
    %520 = vmatpush1.msra.mxu0 %v510
    %521 = vmatprep.subr.mxu0 0.0
    %522 = vmatpush1.msra.mxu0 %v511
    %523 = vmatprep.subr.mxu0 0.0
    %524 = vmatpush1.msra.mxu0 0.0
    %525 = vmatprep.subr.mxu0 0.0
    %526 = vmatpush1.msra.mxu0 0.0
    %527 = vmatprep.subr.mxu0 0.0
    %528 = vmatpush1.msra.mxu0 0.0
    %529 = vmatprep.subr.mxu0 0.0
    %530 = vmatpush1.msra.mxu0 0.0
    %531 = vmatprep.subr.mxu0 0.0
    %532 = vmatpush1.msra.mxu0 0.0
    %533 = vmatprep.subr.mxu0 0.0
    %534 = vmatpush1.msra.mxu0 0.0
    %535 = vmatprep.subr.mxu0 0.0
    %536 = vmatpush1.msra.mxu0 0.0
    %537 = vmatprep.subr.mxu0 0.0
    %538 = vmatpush1.msra.mxu0 0.0
    %539 = vmatprep.subr.mxu0 0.0
    %540 = vmatpush1.msra.mxu0 0.0
    %541 = vmatprep.subr.mxu0 0.0
    %542 = vmatpush1.msra.mxu0 0.0
    %543 = vmatprep.subr.mxu0 0.0
    %544 = vmatpush1.msra.mxu0 0.0
    %545 = vmatprep.subr.mxu0 0.0
    %546 = vmatpush1.msra.mxu0 0.0
    %547 = vmatprep.subr.mxu0 0.0
    %548 = vmatpush1.msra.mxu0 0.0
    %549 = vmatprep.subr.mxu0 0.0
    %550 = vmatpush1.msra.mxu0 0.0
    %551 = vmatprep.subr.mxu0 0.0
    %552 = vmatpush1.msra.mxu0 0.0
    %553 = vmatprep.subr.mxu0 0.0
    %554 = vmatpush1.msra.mxu0 0.0
    %555 = vmatprep.subr.mxu0 0.0
    %556 = vmatpush1.msra.mxu0 0.0
    %557 = vmatprep.subr.mxu0 0.0
    %558 = vmatpush1.msra.mxu0 0.0
    %559 = vmatprep.subr.mxu0 0.0
    %560 = vmatpush1.msra.mxu0 0.0
    %561 = vmatprep.subr.mxu0 0.0
    %562 = vmatpush1.msra.mxu0 0.0
    %563 = vmatprep.subr.mxu0 0.0
    %564 = vmatpush1.msra.mxu0 0.0
    %565 = vmatprep.subr.mxu0 0.0
    %566 = vmatpush1.msra.mxu0 0.0
    %567 = vmatprep.subr.mxu0 0.0
    %568 = vmatpush1.msra.mxu0 0.0
    %569 = vmatprep.subr.mxu0 0.0
    %570 = vmatpush1.msra.mxu0 0.0
    %571 = vmatprep.subr.mxu0 0.0
    %572 = vmatpush1.msra.mxu0 0.0
    %573 = vmatprep.subr.mxu0 0.0
    %574 = vmatpush1.msra.mxu0 0.0
    %575 = vmatprep.subr.mxu0 0.0
    %576 = vmatpush1.msra.mxu0 0.0
    %577 = vmatprep.subr.mxu0 0.0
    %578 = vmatpush1.msra.mxu0 0.0
    %579 = vmatprep.mubr.f32.mxu0 0.0
    %580 = vmatmul.mubr.f32.gmra.mrb[0].mxu0 %v513
    %v581 = vpop.f32.mrb[0].mxu0
    %v582 = vadd.f32 0.0, %v581
    %v583 = vpop.f32.mrb[0].mxu0
    %584 = vdwg.mxu0
    %s585 = scalar_lea.vmem %s6, 1
    %v586 = vld [vmem:[%s585] sm:$0x1]
    %s587 = scalar_lea.vmem %s7, 1
    %v588 = vld [vmem:[%s587] sm:$0x1]
    %v589 = vsel %vm214, %v582, 0.0
    %590 = vadd.xlane.f32.xlu0 %v589
    %v591 = vpop.xlane.xlu0 %590
    %v592 = vmul.f32 %v591, 0.03125
    %v593 = vmul.f32 %v582, %v582
    %v594 = vsel %vm214, %v593, 0.0
    %595 = vadd.xlane.f32.xlu0 %v594
    %v596 = vpop.xlane.xlu0 %595
    %v597 = vmul.f32 %v596, 0.03125
    %v598 = vmul.f32 %v592, %v592
    %v599 = vsub.f32 %v597, %v598
    %v600 = vsub.f32 %v582, %v592
    %v601 = vadd.f32 %v599, 1e-05
    %v602 = vrsqrt.pop %v601
    %v603 = vmul.f32 %v600, %v602
    %v605 = vlaneseq
    %v606 = vshrl.u32 %v605, 7
    %v607 = vsub.s32 0, %v606
    %v608 = vrot.slane %v586, %v607
    %v610 = vmul.f32 %v603, %v608
    %v612 = vlaneseq
    %v613 = vshrl.u32 %v612, 7
    %v614 = vsub.s32 0, %v613
    %v615 = vrot.slane %v588, %v614
    %v617 = vadd.f32 %v610, %v615
    %v618 = vmax.f32 %v617, 0.0
    %s619 = scalar_lea.vmem %s8, 32
    %v620 = vld [vmem:[%s619] sm:$0xff]
    %v621 = vld [vmem:[%s619 + $0x8] sm:$0xff]
    %v622 = vld [vmem:[%s619 + $0x10] sm:$0xff]
    %v623 = vld [vmem:[%s619 + $0x18] sm:$0xff]
    %v625 = vsel %vm214, %v618, 0
    %627 = vmatprep.subr.mxu0 0.0
    %628 = vmatpush1.msra.mxu0 %v620
    %629 = vmatprep.subr.mxu0 0.0
    %630 = vmatpush1.msra.mxu0 %v621
    %631 = vmatprep.subr.mxu0 0.0
    %632 = vmatpush1.msra.mxu0 %v622
    %633 = vmatprep.subr.mxu0 0.0
    %634 = vmatpush1.msra.mxu0 %v623
    %635 = vmatprep.subr.mxu0 0.0
    %636 = vmatpush1.msra.mxu0 0.0
    %637 = vmatprep.subr.mxu0 0.0
    %638 = vmatpush1.msra.mxu0 0.0
    %639 = vmatprep.subr.mxu0 0.0
    %640 = vmatpush1.msra.mxu0 0.0
    %641 = vmatprep.subr.mxu0 0.0
    %642 = vmatpush1.msra.mxu0 0.0
    %643 = vmatprep.subr.mxu0 0.0
    %644 = vmatpush1.msra.mxu0 0.0
    %645 = vmatprep.subr.mxu0 0.0
    %646 = vmatpush1.msra.mxu0 0.0
    %647 = vmatprep.subr.mxu0 0.0
    %648 = vmatpush1.msra.mxu0 0.0
    %649 = vmatprep.subr.mxu0 0.0
    %650 = vmatpush1.msra.mxu0 0.0
    %651 = vmatprep.subr.mxu0 0.0
    %652 = vmatpush1.msra.mxu0 0.0
    %653 = vmatprep.subr.mxu0 0.0
    %654 = vmatpush1.msra.mxu0 0.0
    %655 = vmatprep.subr.mxu0 0.0
    %656 = vmatpush1.msra.mxu0 0.0
    %657 = vmatprep.subr.mxu0 0.0
    %658 = vmatpush1.msra.mxu0 0.0
    %659 = vmatprep.subr.mxu0 0.0
    %660 = vmatpush1.msra.mxu0 0.0
    %661 = vmatprep.subr.mxu0 0.0
    %662 = vmatpush1.msra.mxu0 0.0
    %663 = vmatprep.subr.mxu0 0.0
    %664 = vmatpush1.msra.mxu0 0.0
    %665 = vmatprep.subr.mxu0 0.0
    %666 = vmatpush1.msra.mxu0 0.0
    %667 = vmatprep.subr.mxu0 0.0
    %668 = vmatpush1.msra.mxu0 0.0
    %669 = vmatprep.subr.mxu0 0.0
    %670 = vmatpush1.msra.mxu0 0.0
    %671 = vmatprep.subr.mxu0 0.0
    %672 = vmatpush1.msra.mxu0 0.0
    %673 = vmatprep.subr.mxu0 0.0
    %674 = vmatpush1.msra.mxu0 0.0
    %675 = vmatprep.subr.mxu0 0.0
    %676 = vmatpush1.msra.mxu0 0.0
    %677 = vmatprep.subr.mxu0 0.0
    %678 = vmatpush1.msra.mxu0 0.0
    %679 = vmatprep.subr.mxu0 0.0
    %680 = vmatpush1.msra.mxu0 0.0
    %681 = vmatprep.subr.mxu0 0.0
    %682 = vmatpush1.msra.mxu0 0.0
    %683 = vmatprep.subr.mxu0 0.0
    %684 = vmatpush1.msra.mxu0 0.0
    %685 = vmatprep.subr.mxu0 0.0
    %686 = vmatpush1.msra.mxu0 0.0
    %687 = vmatprep.subr.mxu0 0.0
    %688 = vmatpush1.msra.mxu0 0.0
    %689 = vmatprep.subr.mxu0 0.0
    %690 = vmatpush1.msra.mxu0 0.0
    %691 = vmatprep.mubr.f32.mxu0 0.0
    %692 = vmatmul.mubr.f32.gmra.mrb[0].mxu0 %v625
    %v693 = vpop.f32.mrb[0].mxu0
    %v694 = vadd.f32 0.0, %v693
    %v695 = vpop.f32.mrb[0].mxu0
    %696 = vdwg.mxu0
    %s697 = scalar_lea.vmem [#allocation11], 1
    %v698 = vld [vmem:[%s697] sm:$0x1]
    %s699 = scalar_lea.vmem [#allocation13], 1
    %v700 = vld [vmem:[%s699] sm:$0x1]
    %v701 = vsel %vm214, %v694, 0.0
    %702 = vadd.xlane.f32.xlu0 %v701
    %v703 = vpop.xlane.xlu0 %702
    %v704 = vmul.f32 %v703, 0.03125
    %v705 = vmul.f32 %v694, %v694
    %v706 = vsel %vm214, %v705, 0.0
    %707 = vadd.xlane.f32.xlu0 %v706
    %v708 = vpop.xlane.xlu0 %707
    %v709 = vmul.f32 %v708, 0.03125
    %v710 = vmul.f32 %v704, %v704
    %v711 = vsub.f32 %v709, %v710
    %v712 = vsub.f32 %v694, %v704
    %v713 = vadd.f32 %v711, 1e-05
    %v714 = vrsqrt.pop %v713
    %v715 = vmul.f32 %v712, %v714
    %v717 = vlaneseq
    %v718 = vshrl.u32 %v717, 7
    %v719 = vsub.s32 0, %v718
    %v720 = vrot.slane %v698, %v719
    %v722 = vmul.f32 %v715, %v720
    %v724 = vlaneseq
    %v725 = vshrl.u32 %v724, 7
    %v726 = vsub.s32 0, %v725
    %v727 = vrot.slane %v700, %v726
    %v729 = vadd.f32 %v722, %v727
    %v730 = vadd.f32 %v729, %v506
    %v731 = vmax.f32 %v730, 0.0
    %v732 = vld [vmem:[%s11] sm:$0xff]
    %v733 = vld [vmem:[%s11 + $0x8] sm:$0xff]
    %v734 = vld [vmem:[%s11 + $0x10] sm:$0xff]
    %v735 = vld [vmem:[%s11 + $0x18] sm:$0xff]
    %v736 = vld [vmem:[%s11 + $0x20] sm:$0xff]
    %v737 = vld [vmem:[%s11 + $0x28] sm:$0xff]
    %v738 = vld [vmem:[%s12] sm:$0x7]
    %v740 = vlaneseq
    %v741 = vshrl.u32 %v740, 7
    %v742 = vsub.s32 0, %v741
    %v743 = vrot.slane %v738, %v742
    %v744 = vlaneseq
    %v745 = vshrl.u32 %v744, 7
    %v746 = vsub.s32 1, %v745
    %v747 = vrot.slane %v738, %v746
    %v748 = vlaneseq
    %v749 = vshrl.u32 %v748, 7
    %v750 = vsub.s32 2, %v749
    %v751 = vrot.slane %v738, %v750
    %vm755 = vcmask 130048
    %v757 = vsel %vm755, %v202, 0
    %759 = vmatprep.subr.mxu0 %v733
    %760 = vmatpush1.msra.mxu0 %v732
    %761 = vmatprep.subr.mxu0 %v736
    %762 = vmatpush1.msra.mxu0 %v735
    %763 = vmatprep.subr.mxu0 0.0
    %764 = vmatpush1.msra.mxu0 0.0
    %765 = vmatprep.subr.mxu0 0.0
    %766 = vmatpush1.msra.mxu0 0.0
    %767 = vmatprep.subr.mxu0 0.0
    %768 = vmatpush1.msra.mxu0 0.0
    %769 = vmatprep.subr.mxu0 0.0
    %770 = vmatpush1.msra.mxu0 0.0
    %771 = vmatprep.subr.mxu0 0.0
    %772 = vmatpush1.msra.mxu0 0.0
    %773 = vmatprep.subr.mxu0 0.0
    %774 = vmatpush1.msra.mxu0 0.0
    %775 = vmatprep.subr.mxu0 0.0
    %776 = vmatpush1.msra.mxu0 0.0
    %777 = vmatprep.subr.mxu0 0.0
    %778 = vmatpush1.msra.mxu0 0.0
    %779 = vmatprep.subr.mxu0 0.0
    %780 = vmatpush1.msra.mxu0 0.0
    %781 = vmatprep.subr.mxu0 0.0
    %782 = vmatpush1.msra.mxu0 0.0
    %783 = vmatprep.subr.mxu0 0.0
    %784 = vmatpush1.msra.mxu0 0.0
    %785 = vmatprep.subr.mxu0 0.0
    %786 = vmatpush1.msra.mxu0 0.0
    %787 = vmatprep.subr.mxu0 0.0
    %788 = vmatpush1.msra.mxu0 0.0
    %789 = vmatprep.subr.mxu0 0.0
    %790 = vmatpush1.msra.mxu0 0.0
    %791 = vmatprep.subr.mxu0 0.0
    %792 = vmatpush1.msra.mxu0 0.0
    %793 = vmatprep.subr.mxu0 0.0
    %794 = vmatpush1.msra.mxu0 0.0
    %795 = vmatprep.subr.mxu0 0.0
    %796 = vmatpush1.msra.mxu0 0.0
    %797 = vmatprep.subr.mxu0 0.0
    %798 = vmatpush1.msra.mxu0 0.0
    %799 = vmatprep.subr.mxu0 0.0
    %800 = vmatpush1.msra.mxu0 0.0
    %801 = vmatprep.subr.mxu0 0.0
    %802 = vmatpush1.msra.mxu0 0.0
    %803 = vmatprep.subr.mxu0 0.0
    %804 = vmatpush1.msra.mxu0 0.0
    %805 = vmatprep.subr.mxu0 0.0
    %806 = vmatpush1.msra.mxu0 0.0
    %807 = vmatprep.subr.mxu0 0.0
    %808 = vmatpush1.msra.mxu0 0.0
    %809 = vmatprep.subr.mxu0 0.0
    %810 = vmatpush1.msra.mxu0 0.0
    %811 = vmatprep.subr.mxu0 0.0
    %812 = vmatpush1.msra.mxu0 0.0
    %813 = vmatprep.subr.mxu0 0.0
    %814 = vmatpush1.msra.mxu0 0.0
    %815 = vmatprep.subr.mxu0 0.0
    %816 = vmatpush1.msra.mxu0 0.0
    %817 = vmatprep.subr.mxu0 0.0
    %818 = vmatpush1.msra.mxu0 0.0
    %819 = vmatprep.subr.mxu0 0.0
    %820 = vmatpush1.msra.mxu0 0.0
    %821 = vmatprep.subr.mxu0 0.0
    %822 = vmatpush1.msra.mxu0 0.0
    %823 = vmatprep.mubr.f32.mxu0 0.0
    %824 = vmatmul.mubr.f32.gmra.mrb[0].mxu0 %v757
    %v825 = vpop.f32.mrb[0].mxu0
    %v826 = vadd.f32 %v743, %v825
    %v827 = vpop.f32.mrb[0].mxu0
    %v828 = vadd.f32 %v747, %v827
    %829 = vdwg.mxu0
    %830 = vmatprep.subr.mxu0 0.0
    %831 = vmatpush1.msra.mxu0 %v734
    %832 = vmatprep.subr.mxu0 0.0
    %833 = vmatpush1.msra.mxu0 %v737
    %834 = vmatprep.subr.mxu0 0.0
    %835 = vmatpush1.msra.mxu0 0.0
    %836 = vmatprep.subr.mxu0 0.0
    %837 = vmatpush1.msra.mxu0 0.0
    %838 = vmatprep.subr.mxu0 0.0
    %839 = vmatpush1.msra.mxu0 0.0
    %840 = vmatprep.subr.mxu0 0.0
    %841 = vmatpush1.msra.mxu0 0.0
    %842 = vmatprep.subr.mxu0 0.0
    %843 = vmatpush1.msra.mxu0 0.0
    %844 = vmatprep.subr.mxu0 0.0
    %845 = vmatpush1.msra.mxu0 0.0
    %846 = vmatprep.subr.mxu0 0.0
    %847 = vmatpush1.msra.mxu0 0.0
    %848 = vmatprep.subr.mxu0 0.0
    %849 = vmatpush1.msra.mxu0 0.0
    %850 = vmatprep.subr.mxu0 0.0
    %851 = vmatpush1.msra.mxu0 0.0
    %852 = vmatprep.subr.mxu0 0.0
    %853 = vmatpush1.msra.mxu0 0.0
    %854 = vmatprep.subr.mxu0 0.0
    %855 = vmatpush1.msra.mxu0 0.0
    %856 = vmatprep.subr.mxu0 0.0
    %857 = vmatpush1.msra.mxu0 0.0
    %858 = vmatprep.subr.mxu0 0.0
    %859 = vmatpush1.msra.mxu0 0.0
    %860 = vmatprep.subr.mxu0 0.0
    %861 = vmatpush1.msra.mxu0 0.0
    %862 = vmatprep.subr.mxu0 0.0
    %863 = vmatpush1.msra.mxu0 0.0
    %864 = vmatprep.subr.mxu0 0.0
    %865 = vmatpush1.msra.mxu0 0.0
    %866 = vmatprep.subr.mxu0 0.0
    %867 = vmatpush1.msra.mxu0 0.0
    %868 = vmatprep.subr.mxu0 0.0
    %869 = vmatpush1.msra.mxu0 0.0
    %870 = vmatprep.subr.mxu0 0.0
    %871 = vmatpush1.msra.mxu0 0.0
    %872 = vmatprep.subr.mxu0 0.0
    %873 = vmatpush1.msra.mxu0 0.0
    %874 = vmatprep.subr.mxu0 0.0
    %875 = vmatpush1.msra.mxu0 0.0
    %876 = vmatprep.subr.mxu0 0.0
    %877 = vmatpush1.msra.mxu0 0.0
    %878 = vmatprep.subr.mxu0 0.0
    %879 = vmatpush1.msra.mxu0 0.0
    %880 = vmatprep.subr.mxu0 0.0
    %881 = vmatpush1.msra.mxu0 0.0
    %882 = vmatprep.subr.mxu0 0.0
    %883 = vmatpush1.msra.mxu0 0.0
    %884 = vmatprep.subr.mxu0 0.0
    %885 = vmatpush1.msra.mxu0 0.0
    %886 = vmatprep.subr.mxu0 0.0
    %887 = vmatpush1.msra.mxu0 0.0
    %888 = vmatprep.subr.mxu0 0.0
    %889 = vmatpush1.msra.mxu0 0.0
    %890 = vmatprep.subr.mxu0 0.0
    %891 = vmatpush1.msra.mxu0 0.0
    %892 = vmatprep.subr.mxu0 0.0
    %893 = vmatpush1.msra.mxu0 0.0
    %894 = vmatprep.mubr.f32.mxu0 0.0
    %895 = vmatmul.mubr.f32.gmra.mrb[0].mxu0 %v757
    %v896 = vpop.f32.mrb[0].mxu0
    %v897 = vadd.f32 %v751, %v896
    %v898 = vpop.f32.mrb[0].mxu0
    %899 = vdwg.mxu0
    %v900 = vxor.u32 %v826, 2147483648
    %v901 = vxor.u32 %v828, 2147483648
    %v902 = vxor.u32 %v897, 2147483648
    %v903 = vmul.f32 %v900, 1.442695
    %v904 = vpow.pop %v903
    %v905 = vmul.f32 %v901, 1.442695
    %v906 = vpow.pop %v905
    %v907 = vmul.f32 %v902, 1.442695
    %v908 = vpow.pop %v907
    %v909 = vadd.f32 %v904, 1.0
    %v910 = vadd.f32 %v906, 1.0
    %v911 = vadd.f32 %v908, 1.0
    %v912 = vrcp.pop %v909
    %v913 = vmul.f32 1.0, %v912
    %v914 = vrcp.pop %v910
    %v915 = vmul.f32 1.0, %v914
    %v916 = vrcp.pop %v911
    %v917 = vmul.f32 1.0, %v916
    %v918 = vmul.f32 %v913, %v731
    %v919 = vld [vmem:[#allocation14] sm:$0xff]
    %v920 = vld [vmem:[#allocation14 + $0x8] sm:$0xff]
    %v921 = vld [vmem:[#allocation14 + $0x10] sm:$0xff]
    %v922 = vld [vmem:[#allocation14 + $0x18] sm:$0xff]
    %v923 = vld [vmem:[%s14] sm:$0x1]
    %v925 = vlaneseq
    %v926 = vshrl.u32 %v925, 7
    %v927 = vsub.s32 0, %v926
    %v928 = vrot.slane %v923, %v927
    %v931 = vsel %vm214, %v918, 0
    %933 = vmatprep.subr.mxu0 0.0
    %934 = vmatpush1.msra.mxu0 %v919
    %935 = vmatprep.subr.mxu0 0.0
    %936 = vmatpush1.msra.mxu0 %v920
    %937 = vmatprep.subr.mxu0 0.0
    %938 = vmatpush1.msra.mxu0 %v921
    %939 = vmatprep.subr.mxu0 0.0
    %940 = vmatpush1.msra.mxu0 %v922
    %941 = vmatprep.subr.mxu0 0.0
    %942 = vmatpush1.msra.mxu0 0.0
    %943 = vmatprep.subr.mxu0 0.0
    %944 = vmatpush1.msra.mxu0 0.0
    %945 = vmatprep.subr.mxu0 0.0
    %946 = vmatpush1.msra.mxu0 0.0
    %947 = vmatprep.subr.mxu0 0.0
    %948 = vmatpush1.msra.mxu0 0.0
    %949 = vmatprep.subr.mxu0 0.0
    %950 = vmatpush1.msra.mxu0 0.0
    %951 = vmatprep.subr.mxu0 0.0
    %952 = vmatpush1.msra.mxu0 0.0
    %953 = vmatprep.subr.mxu0 0.0
    %954 = vmatpush1.msra.mxu0 0.0
    %955 = vmatprep.subr.mxu0 0.0
    %956 = vmatpush1.msra.mxu0 0.0
    %957 = vmatprep.subr.mxu0 0.0
    %958 = vmatpush1.msra.mxu0 0.0
    %959 = vmatprep.subr.mxu0 0.0
    %960 = vmatpush1.msra.mxu0 0.0
    %961 = vmatprep.subr.mxu0 0.0
    %962 = vmatpush1.msra.mxu0 0.0
    %963 = vmatprep.subr.mxu0 0.0
    %964 = vmatpush1.msra.mxu0 0.0
    %965 = vmatprep.subr.mxu0 0.0
    %966 = vmatpush1.msra.mxu0 0.0
    %967 = vmatprep.subr.mxu0 0.0
    %968 = vmatpush1.msra.mxu0 0.0
    %969 = vmatprep.subr.mxu0 0.0
    %970 = vmatpush1.msra.mxu0 0.0
    %971 = vmatprep.subr.mxu0 0.0
    %972 = vmatpush1.msra.mxu0 0.0
    %973 = vmatprep.subr.mxu0 0.0
    %974 = vmatpush1.msra.mxu0 0.0
    %975 = vmatprep.subr.mxu0 0.0
    %976 = vmatpush1.msra.mxu0 0.0
    %977 = vmatprep.subr.mxu0 0.0
    %978 = vmatpush1.msra.mxu0 0.0
    %979 = vmatprep.subr.mxu0 0.0
    %980 = vmatpush1.msra.mxu0 0.0
    %981 = vmatprep.subr.mxu0 0.0
    %982 = vmatpush1.msra.mxu0 0.0
    %983 = vmatprep.subr.mxu0 0.0
    %984 = vmatpush1.msra.mxu0 0.0
    %985 = vmatprep.subr.mxu0 0.0
    %986 = vmatpush1.msra.mxu0 0.0
    %987 = vmatprep.subr.mxu0 0.0
    %988 = vmatpush1.msra.mxu0 0.0
    %989 = vmatprep.subr.mxu0 0.0
    %990 = vmatpush1.msra.mxu0 0.0
    %991 = vmatprep.subr.mxu0 0.0
    %992 = vmatpush1.msra.mxu0 0.0
    %993 = vmatprep.subr.mxu0 0.0
    %994 = vmatpush1.msra.mxu0 0.0
    %995 = vmatprep.subr.mxu0 0.0
    %996 = vmatpush1.msra.mxu0 0.0
    %997 = vmatprep.mubr.f32.mxu0 0.0
    %998 = vmatmul.mubr.f32.gmra.mrb[0].mxu0 %v931
    %v999 = vpop.f32.mrb[0].mxu0
    %v1000 = vadd.f32 %v928, %v999
    %v1001 = vpop.f32.mrb[0].mxu0
    %1002 = vdwg.mxu0
    %1003 = vst [vmem:[#allocation19] sm:$0xff] %v1000
    %v1004 = vld [vmem:[#allocation7] sm:$0xff]
    %v1005 = vadd.f32 %v1000, %v1004
    %1006 = vmax.xlane.f32.xlu0 %v1005
    %v1007 = vpop.xlane.xlu0 %1006
    %v1008 = vlaneseq
    %v1009 = vand.u32 %v1008, 127
    %vm1010 = vcmp.ge.f32.partialorder %v1005, %v1007
    %v1011 = vsel %vm1010, %v1009, 128
    %v1012 = vand.u32 %v1011, 65535
    %v1013 = vshra.s32 %v1011, 16
    %v1014 = vcvt.s32.f32 %v1012
    %v1015 = vcvt.s32.f32 %v1013
    %1016 = vmin.xlane.f32.xlu0 %v1015
    %v1017 = vpop.xlane.xlu0 %1016
    %vm1018 = vcmp.eq.f32.partialorder %v1015, %v1017
    %v1019 = vsel %vm1018, %v1014, inf
    %1020 = vmin.xlane.f32.xlu0 %v1019
    %v1021 = vpop.xlane.xlu0 %1020
    %v1022 = vcvt.f32.s32 %v1021
    %v1023 = vcvt.f32.s32 %v1017
    %v1024 = vshll.u32 %v1023, 16
    %v1025 = vadd.s32 %v1024, %v1022
    %1026 = vst [vmem:[#allocation20] sm:$0xff] %v1025
    %vm1027 = vcmp.eq.s32.totalorder %v1009, %v1025
    %v1028 = vsel %vm1027, 1, 0
    %v1029 = vcvt.s32.f32 %v1028
    %v1030 = vld [vmem:[%s15] sm:$0xff]
    %v1031 = vld [vmem:[%s15 + $0x8] sm:$0xff]
    %v1032 = vld [vmem:[%s15 + $0x10] sm:$0xff]
    %v1033 = vld [vmem:[%s15 + $0x18] sm:$0xff]
    %v1034 = vld [vmem:[%s15 + $0x20] sm:$0xff]
    %v1035 = vld [vmem:[%s15 + $0x28] sm:$0xff]
    %v1036 = vld [vmem:[%s15 + $0x30] sm:$0xff]
    %v1037 = vld [vmem:[%s15 + $0x38] sm:$0xff]
    %v1038 = vld [vmem:[%s15 + $0x40] sm:$0xff]
    %v1039 = vld [vmem:[%s15 + $0x48] sm:$0xff]
    %v1040 = vld [vmem:[%s15 + $0x50] sm:$0xff]
    %v1041 = vld [vmem:[%s15 + $0x58] sm:$0xff]
    %v1042 = vld [vmem:[%s15 + $0x60] sm:$0xff]
    %v1043 = vld [vmem:[%s15 + $0x68] sm:$0xff]
    %v1044 = vld [vmem:[%s15 + $0x70] sm:$0xff]
    %v1045 = vld [vmem:[%s15 + $0x78] sm:$0xff]
    %v1046 = vld [vmem:[%s16] sm:$0x1]
    %v1048 = vlaneseq
    %v1049 = vshrl.u32 %v1048, 7
    %v1050 = vsub.s32 0, %v1049
    %v1051 = vrot.slane %v1046, %v1050
    %1053 = vmatprep.subr.mxu0 0.0
    %1054 = vmatpush1.msra.mxu0 %v1030
    %1055 = vmatprep.subr.mxu0 0.0
    %1056 = vmatpush1.msra.mxu0 %v1031
    %1057 = vmatprep.subr.mxu0 0.0
    %1058 = vmatpush1.msra.mxu0 %v1032
    %1059 = vmatprep.subr.mxu0 0.0
    %1060 = vmatpush1.msra.mxu0 %v1033
    %1061 = vmatprep.subr.mxu0 0.0
    %1062 = vmatpush1.msra.mxu0 %v1034
    %1063 = vmatprep.subr.mxu0 0.0
    %1064 = vmatpush1.msra.mxu0 %v1035
    %1065 = vmatprep.subr.mxu0 0.0
    %1066 = vmatpush1.msra.mxu0 %v1036
    %1067 = vmatprep.subr.mxu0 0.0
    %1068 = vmatpush1.msra.mxu0 %v1037
    %1069 = vmatprep.subr.mxu0 0.0
    %1070 = vmatpush1.msra.mxu0 %v1038
    %1071 = vmatprep.subr.mxu0 0.0
    %1072 = vmatpush1.msra.mxu0 %v1039
    %1073 = vmatprep.subr.mxu0 0.0
    %1074 = vmatpush1.msra.mxu0 %v1040
    %1075 = vmatprep.subr.mxu0 0.0
    %1076 = vmatpush1.msra.mxu0 %v1041
    %1077 = vmatprep.subr.mxu0 0.0
    %1078 = vmatpush1.msra.mxu0 %v1042
    %1079 = vmatprep.subr.mxu0 0.0
    %1080 = vmatpush1.msra.mxu0 %v1043
    %1081 = vmatprep.subr.mxu0 0.0
    %1082 = vmatpush1.msra.mxu0 %v1044
    %1083 = vmatprep.subr.mxu0 0.0
    %1084 = vmatpush1.msra.mxu0 %v1045
    %1085 = vmatprep.subr.mxu0 0.0
    %1086 = vmatpush1.msra.mxu0 0.0
    %1087 = vmatprep.subr.mxu0 0.0
    %1088 = vmatpush1.msra.mxu0 0.0
    %1089 = vmatprep.subr.mxu0 0.0
    %1090 = vmatpush1.msra.mxu0 0.0
    %1091 = vmatprep.subr.mxu0 0.0
    %1092 = vmatpush1.msra.mxu0 0.0
    %1093 = vmatprep.subr.mxu0 0.0
    %1094 = vmatpush1.msra.mxu0 0.0
    %1095 = vmatprep.subr.mxu0 0.0
    %1096 = vmatpush1.msra.mxu0 0.0
    %1097 = vmatprep.subr.mxu0 0.0
    %1098 = vmatpush1.msra.mxu0 0.0
    %1099 = vmatprep.subr.mxu0 0.0
    %1100 = vmatpush1.msra.mxu0 0.0
    %1101 = vmatprep.subr.mxu0 0.0
    %1102 = vmatpush1.msra.mxu0 0.0
    %1103 = vmatprep.subr.mxu0 0.0
    %1104 = vmatpush1.msra.mxu0 0.0
    %1105 = vmatprep.subr.mxu0 0.0
    %1106 = vmatpush1.msra.mxu0 0.0
    %1107 = vmatprep.subr.mxu0 0.0
    %1108 = vmatpush1.msra.mxu0 0.0
    %1109 = vmatprep.subr.mxu0 0.0
    %1110 = vmatpush1.msra.mxu0 0.0
    %1111 = vmatprep.subr.mxu0 0.0
    %1112 = vmatpush1.msra.mxu0 0.0
    %1113 = vmatprep.subr.mxu0 0.0
    %1114 = vmatpush1.msra.mxu0 0.0
    %1115 = vmatprep.subr.mxu0 0.0
    %1116 = vmatpush1.msra.mxu0 0.0
    %1117 = vmatprep.mubr.f32.mxu0 0.0
    %1118 = vmatmul.mubr.f32.gmra.mrb[0].mxu0 %v1029
    %v1119 = vpop.f32.mrb[0].mxu0
    %v1120 = vadd.f32 %v1051, %v1119
    %v1121 = vpop.f32.mrb[0].mxu0
    %1122 = vdwg.mxu0
    %v1123 = vmax.f32 %v1120, 0.0
    %v1124 = vmul.f32 %v915, %v1123
    %v1125 = vld [vmem:[#allocation16] sm:$0xff]
    %v1126 = vld [vmem:[#allocation16 + $0x8] sm:$0xff]
    %v1127 = vld [vmem:[#allocation16 + $0x10] sm:$0xff]
    %v1128 = vld [vmem:[#allocation16 + $0x18] sm:$0xff]
    %v1129 = vld [vmem:[%s18] sm:$0x1]
    %v1131 = vlaneseq
    %v1132 = vshrl.u32 %v1131, 7
    %v1133 = vsub.s32 0, %v1132
    %v1134 = vrot.slane %v1129, %v1133
    %v1137 = vsel %vm214, %v1124, 0
    %1139 = vmatprep.subr.mxu0 0.0
    %1140 = vmatpush1.msra.mxu0 %v1125
    %1141 = vmatprep.subr.mxu0 0.0
    %1142 = vmatpush1.msra.mxu0 %v1126
    %1143 = vmatprep.subr.mxu0 0.0
    %1144 = vmatpush1.msra.mxu0 %v1127
    %1145 = vmatprep.subr.mxu0 0.0
    %1146 = vmatpush1.msra.mxu0 %v1128
    %1147 = vmatprep.subr.mxu0 0.0
    %1148 = vmatpush1.msra.mxu0 0.0
    %1149 = vmatprep.subr.mxu0 0.0
    %1150 = vmatpush1.msra.mxu0 0.0
    %1151 = vmatprep.subr.mxu0 0.0
    %1152 = vmatpush1.msra.mxu0 0.0
    %1153 = vmatprep.subr.mxu0 0.0
    %1154 = vmatpush1.msra.mxu0 0.0
    %1155 = vmatprep.subr.mxu0 0.0
    %1156 = vmatpush1.msra.mxu0 0.0
    %1157 = vmatprep.subr.mxu0 0.0
    %1158 = vmatpush1.msra.mxu0 0.0
    %1159 = vmatprep.subr.mxu0 0.0
    %1160 = vmatpush1.msra.mxu0 0.0
    %1161 = vmatprep.subr.mxu0 0.0
    %1162 = vmatpush1.msra.mxu0 0.0
    %1163 = vmatprep.subr.mxu0 0.0
    %1164 = vmatpush1.msra.mxu0 0.0
    %1165 = vmatprep.subr.mxu0 0.0
    %1166 = vmatpush1.msra.mxu0 0.0
    %1167 = vmatprep.subr.mxu0 0.0
    %1168 = vmatpush1.msra.mxu0 0.0
    %1169 = vmatprep.subr.mxu0 0.0
    %1170 = vmatpush1.msra.mxu0 0.0
    %1171 = vmatprep.subr.mxu0 0.0
    %1172 = vmatpush1.msra.mxu0 0.0
    %1173 = vmatprep.subr.mxu0 0.0
    %1174 = vmatpush1.msra.mxu0 0.0
    %1175 = vmatprep.subr.mxu0 0.0
    %1176 = vmatpush1.msra.mxu0 0.0
    %1177 = vmatprep.subr.mxu0 0.0
    %1178 = vmatpush1.msra.mxu0 0.0
    %1179 = vmatprep.subr.mxu0 0.0
    %1180 = vmatpush1.msra.mxu0 0.0
    %1181 = vmatprep.subr.mxu0 0.0
    %1182 = vmatpush1.msra.mxu0 0.0
    %1183 = vmatprep.subr.mxu0 0.0
    %1184 = vmatpush1.msra.mxu0 0.0
    %1185 = vmatprep.subr.mxu0 0.0
    %1186 = vmatpush1.msra.mxu0 0.0
    %1187 = vmatprep.subr.mxu0 0.0
    %1188 = vmatpush1.msra.mxu0 0.0
    %1189 = vmatprep.subr.mxu0 0.0
    %1190 = vmatpush1.msra.mxu0 0.0
    %1191 = vmatprep.subr.mxu0 0.0
    %1192 = vmatpush1.msra.mxu0 0.0
    %1193 = vmatprep.subr.mxu0 0.0
    %1194 = vmatpush1.msra.mxu0 0.0
    %1195 = vmatprep.subr.mxu0 0.0
    %1196 = vmatpush1.msra.mxu0 0.0
    %1197 = vmatprep.subr.mxu0 0.0
    %1198 = vmatpush1.msra.mxu0 0.0
    %1199 = vmatprep.subr.mxu0 0.0
    %1200 = vmatpush1.msra.mxu0 0.0
    %1201 = vmatprep.subr.mxu0 0.0
    %1202 = vmatpush1.msra.mxu0 0.0
    %1203 = vmatprep.mubr.f32.mxu0 0.0
    %1204 = vmatmul.mubr.f32.gmra.mrb[0].mxu0 %v1137
    %v1205 = vpop.f32.mrb[0].mxu0
    %v1206 = vadd.f32 %v1134, %v1205
    %v1207 = vpop.f32.mrb[0].mxu0
    %1208 = vdwg.mxu0
    %v1209 = vmul.f32 %v917, %v201
    %v1210 = vld [vmem:[#allocation17] sm:$0xff]
    %v1211 = vld [vmem:[#allocation17 + $0x8] sm:$0xff]
    %v1212 = vld [vmem:[#allocation17 + $0x10] sm:$0xff]
    %v1213 = vld [vmem:[#allocation17 + $0x18] sm:$0xff]
    %v1214 = vld [vmem:[%s20] sm:$0x1]
    %v1216 = vlaneseq
    %v1217 = vshrl.u32 %v1216, 7
    %v1218 = vsub.s32 0, %v1217
    %v1219 = vrot.slane %v1214, %v1218
    %v1222 = vsel %vm214, %v1209, 0
    %1224 = vmatprep.subr.mxu0 0.0
    %1225 = vmatpush1.msra.mxu0 %v1210
    %1226 = vmatprep.subr.mxu0 0.0
    %1227 = vmatpush1.msra.mxu0 %v1211
    %1228 = vmatprep.subr.mxu0 0.0
    %1229 = vmatpush1.msra.mxu0 %v1212
    %1230 = vmatprep.subr.mxu0 0.0
    %1231 = vmatpush1.msra.mxu0 %v1213
    %1232 = vmatprep.subr.mxu0 0.0
    %1233 = vmatpush1.msra.mxu0 0.0
    %1234 = vmatprep.subr.mxu0 0.0
    %1235 = vmatpush1.msra.mxu0 0.0
    %1236 = vmatprep.subr.mxu0 0.0
    %1237 = vmatpush1.msra.mxu0 0.0
    %1238 = vmatprep.subr.mxu0 0.0
    %1239 = vmatpush1.msra.mxu0 0.0
    %1240 = vmatprep.subr.mxu0 0.0
    %1241 = vmatpush1.msra.mxu0 0.0
    %1242 = vmatprep.subr.mxu0 0.0
    %1243 = vmatpush1.msra.mxu0 0.0
    %1244 = vmatprep.subr.mxu0 0.0
    %1245 = vmatpush1.msra.mxu0 0.0
    %1246 = vmatprep.subr.mxu0 0.0
    %1247 = vmatpush1.msra.mxu0 0.0
    %1248 = vmatprep.subr.mxu0 0.0
    %1249 = vmatpush1.msra.mxu0 0.0
    %1250 = vmatprep.subr.mxu0 0.0
    %1251 = vmatpush1.msra.mxu0 0.0
    %1252 = vmatprep.subr.mxu0 0.0
    %1253 = vmatpush1.msra.mxu0 0.0
    %1254 = vmatprep.subr.mxu0 0.0
    %1255 = vmatpush1.msra.mxu0 0.0
    %1256 = vmatprep.subr.mxu0 0.0
    %1257 = vmatpush1.msra.mxu0 0.0
    %1258 = vmatprep.subr.mxu0 0.0
    %1259 = vmatpush1.msra.mxu0 0.0
    %1260 = vmatprep.subr.mxu0 0.0
    %1261 = vmatpush1.msra.mxu0 0.0
    %1262 = vmatprep.subr.mxu0 0.0
    %1263 = vmatpush1.msra.mxu0 0.0
    %1264 = vmatprep.subr.mxu0 0.0
    %1265 = vmatpush1.msra.mxu0 0.0
    %1266 = vmatprep.subr.mxu0 0.0
    %1267 = vmatpush1.msra.mxu0 0.0
    %1268 = vmatprep.subr.mxu0 0.0
    %1269 = vmatpush1.msra.mxu0 0.0
    %1270 = vmatprep.subr.mxu0 0.0
    %1271 = vmatpush1.msra.mxu0 0.0
    %1272 = vmatprep.subr.mxu0 0.0
    %1273 = vmatpush1.msra.mxu0 0.0
    %1274 = vmatprep.subr.mxu0 0.0
    %1275 = vmatpush1.msra.mxu0 0.0
    %1276 = vmatprep.subr.mxu0 0.0
    %1277 = vmatpush1.msra.mxu0 0.0
    %1278 = vmatprep.subr.mxu0 0.0
    %1279 = vmatpush1.msra.mxu0 0.0
    %1280 = vmatprep.subr.mxu0 0.0
    %1281 = vmatpush1.msra.mxu0 0.0
    %1282 = vmatprep.subr.mxu0 0.0
    %1283 = vmatpush1.msra.mxu0 0.0
    %1284 = vmatprep.subr.mxu0 0.0
    %1285 = vmatpush1.msra.mxu0 0.0
    %1286 = vmatprep.subr.mxu0 0.0
    %1287 = vmatpush1.msra.mxu0 0.0
    %1288 = vmatprep.mubr.f32.mxu0 0.0
    %1289 = vmatmul.mubr.f32.gmra.mrb[0].mxu0 %v1222
    %v1290 = vpop.f32.mrb[0].mxu0
    %v1291 = vadd.f32 %v1219, %v1290
    %v1292 = vpop.f32.mrb[0].mxu0
    %1293 = vdwg.mxu0
    %v1294 = vadd.f32 %v1206, %v1291
    %1295 = vst [vmem:[#allocation22] sm:$0xff] %v1294
    // Predicated region
    $region126: #{tpu_custom_call.1} parent=1 // pred_check
      _
    $region127: #{tpu_custom_call.1} parent=1 // pred_check_branch
      %1297 = sbr.rel (0) target = $region129
    $region128: #{tpu_custom_call.1} parent=1 // pred_region
      %s1299 = ssub.s32 128, 128
      %1300 = vsyncadd [#allocation4], %s1299
      %s1302 = sshll.u32 [#allocation19], 4
      %s1303 = int_to_ptr.vmem [resolvable:$true] %s1302
      %1305 = dma.vmem_to_hbm [thread:$0]  %s1303, 128, %s21, [#allocation4]
    $region129: #{tpu_custom_call.1} parent=1 // pred_fallthru
      _
    // Predicated region
    $region130: #{tpu_custom_call.1} parent=1 // pred_check
      _
    $region131: #{tpu_custom_call.1} parent=1 // pred_check_branch
      %1307 = sbr.rel (0) target = $region133
    $region132: #{tpu_custom_call.1} parent=1 // pred_region
      %s1309 = ssub.s32 128, 128
      %1310 = vsyncadd [#allocation21], %s1309
      %s1312 = sshll.u32 [#allocation20], 4
      %s1313 = int_to_ptr.vmem [resolvable:$true] %s1312
      %1315 = dma.vmem_to_hbm [thread:$0]  %s1313, 128, %s22, [#allocation21]
    $region133: #{tpu_custom_call.1} parent=1 // pred_fallthru
      _
    // Predicated region
    $region134: #{tpu_custom_call.1} parent=1 // pred_check
      _
    $region135: #{tpu_custom_call.1} parent=1 // pred_check_branch
      %1317 = sbr.rel (0) target = $region137
    $region136: #{tpu_custom_call.1} parent=1 // pred_region
      %s1319 = ssub.s32 128, 128
      %1320 = vsyncadd [#allocation21], %s1319
      %s1322 = sshll.u32 [#allocation22], 4
      %s1323 = int_to_ptr.vmem [resolvable:$true] %s1322
      %1325 = dma.vmem_to_hbm [thread:$0]  %s1323, 128, %s23, [#allocation21]
    $region137: #{tpu_custom_call.1} parent=1 // pred_fallthru
      _
    // Predicated region
    $region138: #{tpu_custom_call.1} parent=1 // pred_check
      _
    $region139: #{tpu_custom_call.1} parent=1 // pred_check_branch
      %1327 = sbr.rel (0) target = $region141
    $region140: #{tpu_custom_call.1} parent=1 // pred_region
      %1328 = dma.done [#allocation4], 128
    $region141: #{tpu_custom_call.1} parent=1 // pred_fallthru
      _
    // Predicated region
    $region142: #{tpu_custom_call.1} parent=1 // pred_check
      _
    $region143: #{tpu_custom_call.1} parent=1 // pred_check_branch
      %1330 = sbr.rel (0) target = $region145
    $region144: #{tpu_custom_call.1} parent=1 // pred_region
      %1331 = dma.done [#allocation21], 128
    $region145: #{tpu_custom_call.1} parent=1 // pred_fallthru
      _
    // Predicated region
    $region146: #{tpu_custom_call.1} parent=1 // pred_check
      _
    $region147: #{tpu_custom_call.1} parent=1 // pred_check_branch
      %1333 = sbr.rel (0) target = $region149
    $region148: #{tpu_custom_call.1} parent=1 // pred_region
      %1334 = dma.done [#allocation21], 128
    $region149: #{tpu_custom_call.1} parent=1 // pred_fallthru
      _
    %1335 = vsyncpa [#allocation3], 1
    %1336 = vsyncpa [#allocation6], 1
    %1337 = vsyncpa [#allocation9], 1
    %1338 = vsyncpa [#allocation12], 1
    %1339 = vsyncpa [#allocation15], 1
    %1340 = vsyncpa [#allocation18], 1
    %1341 = vsyncpa [#allocation4], 1
    %1342 = vsyncpa [#allocation21], 1

</llo_original>
